<compile_context>
chip_gen: v7x
topology: tpu7x:2x2x1
jax: 0.10.0
libtpu: 0.0.40
codegen_flags: <defaults>
</compile_context>

<pallas_src>
import jax
import jax.numpy as jnp
from jax.experimental import pallas as pl
from jax.experimental.pallas import tpu as pltpu


def _round_up(x, m):
    return (x + m - 1) // m * m


def _pad2(w, rows, cols):
    return jnp.zeros((rows, cols), w.dtype).at[:w.shape[0], :w.shape[1]].set(w)


def _tpu_budget():
    """Best-effort (vmem_capacity_bytes, n_tensorcores); conservative fallback."""
    vmem_cap = 64 * 1024 * 1024     # v7x-safe default
    n_cores = 1
    try:
        info = pltpu.get_tpu_info()
        cap = int(getattr(info, "vmem_capacity_bytes", 0) or 0)
        if cap > 0:
            vmem_cap = cap
        for attr in ("num_cores", "tensorcores_per_chip", "core_count"):
            v = getattr(info, attr, None)
            if v:
                n_cores = max(1, int(v))
                break
    except Exception:
        pass
    return vmem_cap, n_cores


def rnn_kernel(maxlen_ref, len_ref, xproj_ref, whh0_ref, wih1_ref, whh1_ref, b1_ref,
               out_ref, h_ref):
    """Grid = (batch blocks, time chunks). h_ref holds [h0 | h1] across time chunks."""
    b_blk = pl.program_id(0)
    t_blk = pl.program_id(1)
    n_tblk = pl.num_programs(1)
    Tc, Bb, _ = xproj_ref.shape
    H = whh0_ref.shape[0]
    cdt = whh0_ref.dtype            # MXU input dtype (f32 or bf16)

    # (re)initialize the hidden-state carry at the start of each batch block
    @pl.when(t_blk == 0)
    def _init():
        h_ref[...] = jnp.zeros_like(h_ref)

    t_base = t_blk * Tc

    # skip chunks where every row of this batch block is already past its length
    @pl.when(t_base < maxlen_ref[b_blk])
    def _recurrence():
        whh0 = whh0_ref[...]
        wih1 = wih1_ref[...]
        whh1 = whh1_ref[...]
        b1 = jnp.broadcast_to(b1_ref[...], (Bb, H))      # broadcast hoisted out of loop
        rel_len = len_ref[...] - t_base                  # [Bb, 1], hoisted subtract

        def step(lt, carry):
            h0, h1 = carry
            m = lt < rel_len                             # pack_padded mask (off-chain)
            x_t = xproj_ref[lt].astype(jnp.float32)      # [Bb, H] precomputed projection
            # layer-1 recurrent partial: independent of h0n -> overlaps layer-0 dot+tanh
            p1 = jnp.dot(h1.astype(cdt), whh1, preferred_element_type=jnp.float32)
            # layer 0: only the recurrent dot + tanh sit on the serial chain
            c0 = jnp.tanh(x_t + jnp.dot(h0.astype(cdt), whh0,
                                        preferred_element_type=jnp.float32))
            h0n = jnp.where(m, c0, h0)
            # layer 1
            c1 = jnp.tanh(jnp.dot(h0n.astype(cdt), wih1,
                                  preferred_element_type=jnp.float32) + p1 + b1)
            h1n = jnp.where(m, c1, h1)
            return (h0n, h1n)

        h0, h1 = jax.lax.fori_loop(0, Tc, step,
                                   (h_ref[:, :H], h_ref[:, H:]), unroll=8)
        h_ref[:, :H] = h0
        h_ref[:, H:] = h1

    # emit the last-layer hidden; the final Linear runs in XLA on this output
    @pl.when(t_blk == n_tblk - 1)
    def _finish():
        out_ref[...] = h_ref[:, H:]


def init_params(key, vocab_size, embedding_dim, hidden_dim, output_dim):
    ks = jax.random.split(key, 12)
    bnd = 1.0 / jnp.sqrt(hidden_dim)
    u = lambda k, shape: jax.random.uniform(k, shape, jnp.float32, -bnd, bnd)
    return {
        "embedding": jax.random.normal(ks[0], (vocab_size, embedding_dim), jnp.float32),
        # layer 0 (input = embedding_dim)
        "wih0": u(ks[1], (hidden_dim, embedding_dim)),
        "whh0": u(ks[2], (hidden_dim, hidden_dim)),
        "bih0": u(ks[3], (hidden_dim,)),
        "bhh0": u(ks[4], (hidden_dim,)),
        # layer 1 (input = hidden_dim)
        "wih1": u(ks[5], (hidden_dim, hidden_dim)),
        "whh1": u(ks[6], (hidden_dim, hidden_dim)),
        "bih1": u(ks[7], (hidden_dim,)),
        "bhh1": u(ks[8], (hidden_dim,)),
        # fc
        "fcw": u(ks[9], (output_dim, hidden_dim)),
        "fcb": u(ks[10], (output_dim,)),
    }


def rnn_forward(x_tokens, lengths, params, *, use_bf16=False, stream_bf16=None):
    """x_tokens: [B, T] int32 token ids, lengths: [B] int32 -> [B, output_dim] f32."""
    B, T = x_tokens.shape
    V, E = params["embedding"].shape
    H = params["whh0"].shape[0]
    O = params["fcw"].shape[0]

    cdt = jnp.bfloat16 if use_bf16 else jnp.float32          # MXU weight/input dtype
    if stream_bf16 is None:
        stream_bf16 = use_bf16
    sdt = jnp.bfloat16 if stream_bf16 else jnp.float32       # activation-stream dtype

    H_pad = _round_up(H, 128)

    vmem_cap, n_cores = _tpu_budget()
    vmem_budget = min(vmem_cap // 2, 100 * 1024 * 1024)

    # ---- batch blocking: split across TensorCores when the chip has >= 2 (v7x) ----
    B8 = _round_up(B, 8)
    if n_cores >= 2 and B8 >= 16:
        Bb = min(_round_up(pl.cdiv(B8, n_cores), 8), 128)
    else:
        Bb = min(B8, 128)
    B_pad = _round_up(B8, Bb)
    nB = B_pad // Bb

    # ---- time-chunk size derived from the VMEM budget (v7x 64 MiB safe) ----
    sbytes = jnp.dtype(sdt).itemsize
    wbytes = jnp.dtype(cdt).itemsize
    fixed = (3 * 2 * H_pad * H_pad * wbytes     # whh0, wih1, whh1 (double-buffered)
             + 2 * 1 * H_pad * 4                # b1
             + 2 * Bb * 1 * 4                   # lengths block
             + 2 * Bb * H_pad * 4               # output block
             + Bb * 2 * H_pad * 4)              # hidden-state carry (scratch)
    avail = int(0.8 * vmem_budget) - fixed
    Tc = max(8, min(128, (avail // (2 * Bb * H_pad * sbytes)) // 8 * 8))
    Tc = min(Tc, _round_up(T, 8))
    T_pad = _round_up(T, Tc)
    nT = T_pad // Tc

    # ---- XLA-side preprocessing (gather, layer-0 projection, padding) ----
    lengths = jnp.maximum(lengths, 1).astype(jnp.int32)      # clamp_min(1), as in forward()
    len_p = jnp.zeros((B_pad,), jnp.int32).at[:B].set(lengths)
    maxlen = jnp.max(len_p.reshape(nB, Bb), axis=1).astype(jnp.int32)   # [nB] (scalar prefetch)
    len_col = len_p[:, None]                                            # [B_pad, 1]

    tok_p = jnp.zeros((B_pad, T_pad), jnp.int32).at[:B, :T].set(x_tokens)
    emb = jnp.take(params["embedding"], tok_p.T, axis=0)                # [T_pad, B_pad, E] f32

    # layer-0 input projection as one large matmul off the serial chain
    wih0_t = jnp.zeros((E, H_pad), jnp.float32).at[:, :H].set(params["wih0"].T)
    b0 = jnp.zeros((H_pad,), jnp.float32).at[:H].set(params["bih0"] + params["bhh0"])
    xproj = (jnp.einsum("tbe,eh->tbh", emb, wih0_t) + b0).astype(sdt)   # [T_pad, B_pad, H_pad]

    # recurrent weights, pre-transposed to [in, out] and zero-padded to lane granularity
    whh0 = _pad2(params["whh0"].T, H_pad, H_pad).astype(cdt)
    wih1 = _pad2(params["wih1"].T, H_pad, H_pad).astype(cdt)
    whh1 = _pad2(params["whh1"].T, H_pad, H_pad).astype(cdt)
    b1 = jnp.zeros((1, H_pad), jnp.float32).at[0, :H].set(params["bih1"] + params["bhh1"])

    grid_spec = pltpu.PrefetchScalarGridSpec(
        num_scalar_prefetch=1,
        grid=(nB, nT),
        in_specs=[
            pl.BlockSpec((Bb, 1), lambda b, t, *_: (b, 0)),              # lengths
            pl.BlockSpec((Tc, Bb, H_pad), lambda b, t, *_: (t, b, 0)),   # xproj (streamed)
            pl.BlockSpec((H_pad, H_pad), lambda b, t, *_: (0, 0)),       # whh0
            pl.BlockSpec((H_pad, H_pad), lambda b, t, *_: (0, 0)),       # wih1
            pl.BlockSpec((H_pad, H_pad), lambda b, t, *_: (0, 0)),       # whh1
            pl.BlockSpec((1, H_pad), lambda b, t, *_: (0, 0)),           # b1 = bih1 + bhh1
        ],
        out_specs=pl.BlockSpec((Bb, H_pad), lambda b, t, *_: (b, 0)),
        scratch_shapes=[pltpu.VMEM((Bb, 2 * H_pad), jnp.float32)],       # [h0 | h1] carry
    )

    h1_p = pl.pallas_call(
        rnn_kernel,
        out_shape=jax.ShapeDtypeStruct((B_pad, H_pad), jnp.float32),
        grid_spec=grid_spec,
        compiler_params=pltpu.CompilerParams(
            dimension_semantics=("parallel", "arbitrary"),
            vmem_limit_bytes=int(vmem_budget),
        ),
    )(maxlen, len_col, xproj, whh0, wih1, whh1, b1)

    # final Linear in XLA (dropout is identity in eval mode); avoids pinning fc
    # weights in resident VMEM for the entire grid.
    h1 = h1_p[:B, :H]
    return h1 @ params["fcw"].T + params["fcb"]


def rnn_forward_ref(x_tokens, lengths, p):
    """Pure-JAX reference (same masked-recurrence semantics)."""
    lengths = jnp.maximum(lengths, 1)
    emb = p["embedding"][x_tokens]
    B, T, _ = emb.shape
    H = p["whh0"].shape[0]
    h0 = jnp.zeros((B, H), jnp.float32)
    h1 = jnp.zeros((B, H), jnp.float32)
    for t in range(T):
        x_t = emb[:, t, :]
        mask = (t < lengths)[:, None]
        c0 = jnp.tanh(x_t @ p["wih0"].T + h0 @ p["whh0"].T + p["bih0"] + p["bhh0"])
        h0 = jnp.where(mask, c0, h0)
        c1 = jnp.tanh(h0 @ p["wih1"].T + h1 @ p["whh1"].T + p["bih1"] + p["bhh1"])
        h1 = jnp.where(mask, c1, h1)
    return h1 @ p["fcw"].T + p["fcb"]


if __name__ == "__main__":
    vocab_size, embedding_dim, hidden_dim, output_dim = 50, 32, 32, 4
    B, T = 2, 8

    key = jax.random.PRNGKey(0)
    kp, kx = jax.random.split(key, 2)
    params = init_params(kp, vocab_size, embedding_dim, hidden_dim, output_dim)

    x_tokens = jax.random.randint(kx, (B, T), 0, vocab_size, dtype=jnp.int32)
    lengths = jnp.array([T, T - 3], dtype=jnp.int32)

    ref = rnn_forward_ref(x_tokens, lengths, params)

    # strict f32 path
    out = rnn_forward(x_tokens, lengths, params)
    out = jax.block_until_ready(out)
    assert out.shape == (B, output_dim)
    assert jnp.allclose(out, ref, atol=1e-4, rtol=1e-4), (out, ref)

    # bf16 weight/activation-stream path, validated at a looser tolerance
    out_bf16 = jax.block_until_ready(rnn_forward(x_tokens, lengths, params, use_bf16=True))
    assert out_bf16.shape == (B, output_dim)
    assert jnp.allclose(out_bf16, ref, atol=1e-1, rtol=1e-1), (out_bf16, ref)

    print("KERNEL_OK")
</pallas_src>

<mosaic_0001>
module attributes {stable_mosaic.version = 11 : i64} {
  func.func @rnn_kernel(%arg0: i32, %arg1: i32, %arg2: memref<1xi32, #tpu.memory_space<smem>>, %arg3: memref<8x1xi32, #tpu.memory_space<vmem>>, %arg4: memref<8x8x128xf32, #tpu.memory_space<vmem>>, %arg5: memref<128x128xf32, #tpu.memory_space<vmem>>, %arg6: memref<128x128xf32, #tpu.memory_space<vmem>>, %arg7: memref<128x128xf32, #tpu.memory_space<vmem>>, %arg8: memref<1x128xf32, #tpu.memory_space<vmem>>, %arg9: memref<8x128xf32, #tpu.memory_space<vmem>>, %arg10: memref<8x256xf32, #tpu.memory_space<vmem>>) attributes {dimension_semantics = [#tpu.dimension_semantics<parallel>, #tpu.dimension_semantics<arbitrary>], iteration_bounds = array<i64: 1, 1>, scalar_prefetch = 1 : i64, scratch_operands = 1 : i64, tpu.core_type = #tpu.core_type<tc>, window_params = [{transform_indices = @transform_0, window_bounds = array<i64: 8, 1>}, {transform_indices = @transform_1, window_bounds = array<i64: 8, 8, 128>}, {pipeline_mode = #tpu.pipeline_mode<synchronous>, transform_indices = @transform_2, window_bounds = array<i64: 128, 128>}, {pipeline_mode = #tpu.pipeline_mode<synchronous>, transform_indices = @transform_3, window_bounds = array<i64: 128, 128>}, {pipeline_mode = #tpu.pipeline_mode<synchronous>, transform_indices = @transform_4, window_bounds = array<i64: 128, 128>}, {pipeline_mode = #tpu.pipeline_mode<synchronous>, transform_indices = @transform_5, window_bounds = array<i64: 1, 128>}, {transform_indices = @transform_6, window_bounds = array<i64: 8, 128>}]} {
    %c0_i32 = arith.constant 0 : i32
    %0 = arith.cmpi eq, %arg1, %c0_i32 : i32
    %1 = arith.extui %0 : i1 to i32
    %c0_i32_0 = arith.constant 0 : i32
    %2 = arith.cmpi ne, %1, %c0_i32_0 : i32
    scf.if %2 {
      %cst = arith.constant 0.000000e+00 : f32
      %12 = vector.broadcast %cst : f32 to vector<8x256xf32>
      %c0 = arith.constant 0 : index
      %c0_4 = arith.constant 0 : index
      %13 = vector.load %arg10[%c0, %c0_4] : memref<8x256xf32, #tpu.memory_space<vmem>>, vector<8x256xf32>
      tpu.vector_store %arg10[%c0, %c0_4], %12 {strides = array<i32>} : memref<8x256xf32, #tpu.memory_space<vmem>>, vector<8x256xf32>,
    } else {
    }
    %c8_i32 = arith.constant 8 : i32
    %3 = arith.muli %arg1, %c8_i32 : i32
    %4 = arith.index_cast %arg0 : i32 to index
    %5 = memref.load %arg2[%4] : memref<1xi32, #tpu.memory_space<smem>>
    %6 = arith.cmpi slt, %3, %5 : i32
    %7 = arith.extui %6 : i1 to i32
    %c0_i32_1 = arith.constant 0 : i32
    %8 = arith.cmpi ne, %7, %c0_i32_1 : i32
    scf.if %8 {
      %c0 = arith.constant 0 : index
      %c0_4 = arith.constant 0 : index
      %12 = vector.load %arg5[%c0, %c0_4] : memref<128x128xf32, #tpu.memory_space<vmem>>, vector<128x128xf32>
      %c0_5 = arith.constant 0 : index
      %c0_6 = arith.constant 0 : index
      %13 = vector.load %arg6[%c0_5, %c0_6] : memref<128x128xf32, #tpu.memory_space<vmem>>, vector<128x128xf32>
      %c0_7 = arith.constant 0 : index
      %c0_8 = arith.constant 0 : index
      %14 = vector.load %arg7[%c0_7, %c0_8] : memref<128x128xf32, #tpu.memory_space<vmem>>, vector<128x128xf32>
      %c0_9 = arith.constant 0 : index
      %c0_10 = arith.constant 0 : index
      %15 = vector.load %arg8[%c0_9, %c0_10] : memref<1x128xf32, #tpu.memory_space<vmem>>, vector<1x128xf32>
      %16 = vector.shape_cast %15 : vector<1x128xf32> to vector<1x128xf32>
      %17 = vector.broadcast %16 : vector<1x128xf32> to vector<8x128xf32>
      %c0_11 = arith.constant 0 : index
      %c0_12 = arith.constant 0 : index
      %18 = vector.load %arg3[%c0_11, %c0_12] : memref<8x1xi32, #tpu.memory_space<vmem>>, vector<8x1xi32>
      %19 = vector.broadcast %3 : i32 to vector<8x1xi32>
      %20 = arith.subi %18, %19 : vector<8x1xi32>
      %c0_13 = arith.constant 0 : index
      %c0_14 = arith.constant 0 : index
      %21 = vector.load %arg10[%c0_13, %c0_14] : memref<8x256xf32, #tpu.memory_space<vmem>>, vector<8x128xf32>
      %c0_15 = arith.constant 0 : index
      %c128 = arith.constant 128 : index
      %22 = vector.load %arg10[%c0_15, %c128] : memref<8x256xf32, #tpu.memory_space<vmem>>, vector<8x128xf32>
      %c0_i32_16 = arith.constant 0 : i32
      %23 = vector.broadcast %c0_i32_16 : i32 to vector<8x1xi32>
      %24 = arith.cmpi slt, %23, %20 : vector<8x1xi32>
      %25 = arith.index_cast %c0_i32_16 : i32 to index
      %c0_17 = arith.constant 0 : index
      %c0_18 = arith.constant 0 : index
      %26 = vector.load %arg4[%25, %c0_17, %c0_18] : memref<8x8x128xf32, #tpu.memory_space<vmem>>, vector<1x8x128xf32>
      %27 = vector.shape_cast %26 : vector<1x8x128xf32> to vector<8x128xf32>
      %cst = arith.constant dense<0.000000e+00> : vector<8x128xf32>
      %28 = tpu.matmul %22, %14, %cst {dimension_numbers = #tpu.dot_dimension_numbers<[1], [0], [0], [1], [0, 0, 1, 1], [], []>} : vector<8x128xf32>, vector<128x128xf32>, vector<8x128xf32> -> vector<8x128xf32>
      %cst_19 = arith.constant dense<0.000000e+00> : vector<8x128xf32>
      %29 = tpu.matmul %21, %12, %cst_19 {dimension_numbers = #tpu.dot_dimension_numbers<[1], [0], [0], [1], [0, 0, 1, 1], [], []>} : vector<8x128xf32>, vector<128x128xf32>, vector<8x128xf32> -> vector<8x128xf32>
      %30 = arith.addf %27, %29 : vector<8x128xf32>
      %31 = math.tanh %30 : vector<8x128xf32>
      %32 = vector.shape_cast %24 : vector<8x1xi1> to vector<8x1xi1>
      %33 = vector.broadcast %32 : vector<8x1xi1> to vector<8x128xi1>
      %34 = arith.select %33, %31, %21 : vector<8x128xi1>, vector<8x128xf32>
      %cst_20 = arith.constant dense<0.000000e+00> : vector<8x128xf32>
      %35 = tpu.matmul %34, %13, %cst_20 {dimension_numbers = #tpu.dot_dimension_numbers<[1], [0], [0], [1], [0, 0, 1, 1], [], []>} : vector<8x128xf32>, vector<128x128xf32>, vector<8x128xf32> -> vector<8x128xf32>
      %36 = arith.addf %35, %28 : vector<8x128xf32>
      %37 = arith.addf %36, %17 : vector<8x128xf32>
      %38 = math.tanh %37 : vector<8x128xf32>
      %39 = vector.shape_cast %24 : vector<8x1xi1> to vector<8x1xi1>
      %40 = vector.broadcast %39 : vector<8x1xi1> to vector<8x128xi1>
      %41 = arith.select %40, %38, %22 : vector<8x128xi1>, vector<8x128xf32>
      %c1_i32 = arith.constant 1 : i32
      %42 = vector.broadcast %c1_i32 : i32 to vector<8x1xi32>
      %43 = arith.cmpi slt, %42, %20 : vector<8x1xi32>
      %44 = arith.index_cast %c1_i32 : i32 to index
      %c0_21 = arith.constant 0 : index
      %c0_22 = arith.constant 0 : index
      %45 = vector.load %arg4[%44, %c0_21, %c0_22] : memref<8x8x128xf32, #tpu.memory_space<vmem>>, vector<1x8x128xf32>
      %46 = vector.shape_cast %45 : vector<1x8x128xf32> to vector<8x128xf32>
      %cst_23 = arith.constant dense<0.000000e+00> : vector<8x128xf32>
      %47 = tpu.matmul %41, %14, %cst_23 {dimension_numbers = #tpu.dot_dimension_numbers<[1], [0], [0], [1], [0, 0, 1, 1], [], []>} : vector<8x128xf32>, vector<128x128xf32>, vector<8x128xf32> -> vector<8x128xf32>
      %cst_24 = arith.constant dense<0.000000e+00> : vector<8x128xf32>
      %48 = tpu.matmul %34, %12, %cst_24 {dimension_numbers = #tpu.dot_dimension_numbers<[1], [0], [0], [1], [0, 0, 1, 1], [], []>} : vector<8x128xf32>, vector<128x128xf32>, vector<8x128xf32> -> vector<8x128xf32>
      %49 = arith.addf %46, %48 : vector<8x128xf32>
      %50 = math.tanh %49 : vector<8x128xf32>
      %51 = vector.shape_cast %43 : vector<8x1xi1> to vector<8x1xi1>
      %52 = vector.broadcast %51 : vector<8x1xi1> to vector<8x128xi1>
      %53 = arith.select %52, %50, %34 : vector<8x128xi1>, vector<8x128xf32>
      %cst_25 = arith.constant dense<0.000000e+00> : vector<8x128xf32>
      %54 = tpu.matmul %53, %13, %cst_25 {dimension_numbers = #tpu.dot_dimension_numbers<[1], [0], [0], [1], [0, 0, 1, 1], [], []>} : vector<8x128xf32>, vector<128x128xf32>, vector<8x128xf32> -> vector<8x128xf32>
      %55 = arith.addf %54, %47 : vector<8x128xf32>
      %56 = arith.addf %55, %17 : vector<8x128xf32>
      %57 = math.tanh %56 : vector<8x128xf32>
      %58 = vector.shape_cast %43 : vector<8x1xi1> to vector<8x1xi1>
      %59 = vector.broadcast %58 : vector<8x1xi1> to vector<8x128xi1>
      %60 = arith.select %59, %57, %41 : vector<8x128xi1>, vector<8x128xf32>
      %c2_i32 = arith.constant 2 : i32
      %61 = vector.broadcast %c2_i32 : i32 to vector<8x1xi32>
      %62 = arith.cmpi slt, %61, %20 : vector<8x1xi32>
      %63 = arith.index_cast %c2_i32 : i32 to index
      %c0_26 = arith.constant 0 : index
      %c0_27 = arith.constant 0 : index
      %64 = vector.load %arg4[%63, %c0_26, %c0_27] : memref<8x8x128xf32, #tpu.memory_space<vmem>>, vector<1x8x128xf32>
      %65 = vector.shape_cast %64 : vector<1x8x128xf32> to vector<8x128xf32>
      %cst_28 = arith.constant dense<0.000000e+00> : vector<8x128xf32>
      %66 = tpu.matmul %60, %14, %cst_28 {dimension_numbers = #tpu.dot_dimension_numbers<[1], [0], [0], [1], [0, 0, 1, 1], [], []>} : vector<8x128xf32>, vector<128x128xf32>, vector<8x128xf32> -> vector<8x128xf32>
      %cst_29 = arith.constant dense<0.000000e+00> : vector<8x128xf32>
      %67 = tpu.matmul %53, %12, %cst_29 {dimension_numbers = #tpu.dot_dimension_numbers<[1], [0], [0], [1], [0, 0, 1, 1], [], []>} : vector<8x128xf32>, vector<128x128xf32>, vector<8x128xf32> -> vector<8x128xf32>
      %68 = arith.addf %65, %67 : vector<8x128xf32>
      %69 = math.tanh %68 : vector<8x128xf32>
      %70 = vector.shape_cast %62 : vector<8x1xi1> to vector<8x1xi1>
      %71 = vector.broadcast %70 : vector<8x1xi1> to vector<8x128xi1>
      %72 = arith.select %71, %69, %53 : vector<8x128xi1>, vector<8x128xf32>
      %cst_30 = arith.constant dense<0.000000e+00> : vector<8x128xf32>
      %73 = tpu.matmul %72, %13, %cst_30 {dimension_numbers = #tpu.dot_dimension_numbers<[1], [0], [0], [1], [0, 0, 1, 1], [], []>} : vector<8x128xf32>, vector<128x128xf32>, vector<8x128xf32> -> vector<8x128xf32>
      %74 = arith.addf %73, %66 : vector<8x128xf32>
      %75 = arith.addf %74, %17 : vector<8x128xf32>
      %76 = math.tanh %75 : vector<8x128xf32>
      %77 = vector.shape_cast %62 : vector<8x1xi1> to vector<8x1xi1>
      %78 = vector.broadcast %77 : vector<8x1xi1> to vector<8x128xi1>
      %79 = arith.select %78, %76, %60 : vector<8x128xi1>, vector<8x128xf32>
      %c3_i32 = arith.constant 3 : i32
      %80 = vector.broadcast %c3_i32 : i32 to vector<8x1xi32>
      %81 = arith.cmpi slt, %80, %20 : vector<8x1xi32>
      %82 = arith.index_cast %c3_i32 : i32 to index
      %c0_31 = arith.constant 0 : index
      %c0_32 = arith.constant 0 : index
      %83 = vector.load %arg4[%82, %c0_31, %c0_32] : memref<8x8x128xf32, #tpu.memory_space<vmem>>, vector<1x8x128xf32>
      %84 = vector.shape_cast %83 : vector<1x8x128xf32> to vector<8x128xf32>
      %cst_33 = arith.constant dense<0.000000e+00> : vector<8x128xf32>
      %85 = tpu.matmul %79, %14, %cst_33 {dimension_numbers = #tpu.dot_dimension_numbers<[1], [0], [0], [1], [0, 0, 1, 1], [], []>} : vector<8x128xf32>, vector<128x128xf32>, vector<8x128xf32> -> vector<8x128xf32>
      %cst_34 = arith.constant dense<0.000000e+00> : vector<8x128xf32>
      %86 = tpu.matmul %72, %12, %cst_34 {dimension_numbers = #tpu.dot_dimension_numbers<[1], [0], [0], [1], [0, 0, 1, 1], [], []>} : vector<8x128xf32>, vector<128x128xf32>, vector<8x128xf32> -> vector<8x128xf32>
      %87 = arith.addf %84, %86 : vector<8x128xf32>
      %88 = math.tanh %87 : vector<8x128xf32>
      %89 = vector.shape_cast %81 : vector<8x1xi1> to vector<8x1xi1>
      %90 = vector.broadcast %89 : vector<8x1xi1> to vector<8x128xi1>
      %91 = arith.select %90, %88, %72 : vector<8x128xi1>, vector<8x128xf32>
      %cst_35 = arith.constant dense<0.000000e+00> : vector<8x128xf32>
      %92 = tpu.matmul %91, %13, %cst_35 {dimension_numbers = #tpu.dot_dimension_numbers<[1], [0], [0], [1], [0, 0, 1, 1], [], []>} : vector<8x128xf32>, vector<128x128xf32>, vector<8x128xf32> -> vector<8x128xf32>
      %93 = arith.addf %92, %85 : vector<8x128xf32>
      %94 = arith.addf %93, %17 : vector<8x128xf32>
      %95 = math.tanh %94 : vector<8x128xf32>
      %96 = vector.shape_cast %81 : vector<8x1xi1> to vector<8x1xi1>
      %97 = vector.broadcast %96 : vector<8x1xi1> to vector<8x128xi1>
      %98 = arith.select %97, %95, %79 : vector<8x128xi1>, vector<8x128xf32>
      %c4_i32 = arith.constant 4 : i32
      %99 = vector.broadcast %c4_i32 : i32 to vector<8x1xi32>
      %100 = arith.cmpi slt, %99, %20 : vector<8x1xi32>
      %101 = arith.index_cast %c4_i32 : i32 to index
      %c0_36 = arith.constant 0 : index
      %c0_37 = arith.constant 0 : index
      %102 = vector.load %arg4[%101, %c0_36, %c0_37] : memref<8x8x128xf32, #tpu.memory_space<vmem>>, vector<1x8x128xf32>
      %103 = vector.shape_cast %102 : vector<1x8x128xf32> to vector<8x128xf32>
      %cst_38 = arith.constant dense<0.000000e+00> : vector<8x128xf32>
      %104 = tpu.matmul %98, %14, %cst_38 {dimension_numbers = #tpu.dot_dimension_numbers<[1], [0], [0], [1], [0, 0, 1, 1], [], []>} : vector<8x128xf32>, vector<128x128xf32>, vector<8x128xf32> -> vector<8x128xf32>
      %cst_39 = arith.constant dense<0.000000e+00> : vector<8x128xf32>
      %105 = tpu.matmul %91, %12, %cst_39 {dimension_numbers = #tpu.dot_dimension_numbers<[1], [0], [0], [1], [0, 0, 1, 1], [], []>} : vector<8x128xf32>, vector<128x128xf32>, vector<8x128xf32> -> vector<8x128xf32>
      %106 = arith.addf %103, %105 : vector<8x128xf32>
      %107 = math.tanh %106 : vector<8x128xf32>
      %108 = vector.shape_cast %100 : vector<8x1xi1> to vector<8x1xi1>
      %109 = vector.broadcast %108 : vector<8x1xi1> to vector<8x128xi1>
      %110 = arith.select %109, %107, %91 : vector<8x128xi1>, vector<8x128xf32>
      %cst_40 = arith.constant dense<0.000000e+00> : vector<8x128xf32>
      %111 = tpu.matmul %110, %13, %cst_40 {dimension_numbers = #tpu.dot_dimension_numbers<[1], [0], [0], [1], [0, 0, 1, 1], [], []>} : vector<8x128xf32>, vector<128x128xf32>, vector<8x128xf32> -> vector<8x128xf32>
      %112 = arith.addf %111, %104 : vector<8x128xf32>
      %113 = arith.addf %112, %17 : vector<8x128xf32>
      %114 = math.tanh %113 : vector<8x128xf32>
      %115 = vector.shape_cast %100 : vector<8x1xi1> to vector<8x1xi1>
      %116 = vector.broadcast %115 : vector<8x1xi1> to vector<8x128xi1>
      %117 = arith.select %116, %114, %98 : vector<8x128xi1>, vector<8x128xf32>
      %c5_i32 = arith.constant 5 : i32
      %118 = vector.broadcast %c5_i32 : i32 to vector<8x1xi32>
      %119 = arith.cmpi slt, %118, %20 : vector<8x1xi32>
      %120 = arith.index_cast %c5_i32 : i32 to index
      %c0_41 = arith.constant 0 : index
      %c0_42 = arith.constant 0 : index
      %121 = vector.load %arg4[%120, %c0_41, %c0_42] : memref<8x8x128xf32, #tpu.memory_space<vmem>>, vector<1x8x128xf32>
      %122 = vector.shape_cast %121 : vector<1x8x128xf32> to vector<8x128xf32>
      %cst_43 = arith.constant dense<0.000000e+00> : vector<8x128xf32>
      %123 = tpu.matmul %117, %14, %cst_43 {dimension_numbers = #tpu.dot_dimension_numbers<[1], [0], [0], [1], [0, 0, 1, 1], [], []>} : vector<8x128xf32>, vector<128x128xf32>, vector<8x128xf32> -> vector<8x128xf32>
      %cst_44 = arith.constant dense<0.000000e+00> : vector<8x128xf32>
      %124 = tpu.matmul %110, %12, %cst_44 {dimension_numbers = #tpu.dot_dimension_numbers<[1], [0], [0], [1], [0, 0, 1, 1], [], []>} : vector<8x128xf32>, vector<128x128xf32>, vector<8x128xf32> -> vector<8x128xf32>
      %125 = arith.addf %122, %124 : vector<8x128xf32>
      %126 = math.tanh %125 : vector<8x128xf32>
      %127 = vector.shape_cast %119 : vector<8x1xi1> to vector<8x1xi1>
      %128 = vector.broadcast %127 : vector<8x1xi1> to vector<8x128xi1>
      %129 = arith.select %128, %126, %110 : vector<8x128xi1>, vector<8x128xf32>
      %cst_45 = arith.constant dense<0.000000e+00> : vector<8x128xf32>
      %130 = tpu.matmul %129, %13, %cst_45 {dimension_numbers = #tpu.dot_dimension_numbers<[1], [0], [0], [1], [0, 0, 1, 1], [], []>} : vector<8x128xf32>, vector<128x128xf32>, vector<8x128xf32> -> vector<8x128xf32>
      %131 = arith.addf %130, %123 : vector<8x128xf32>
      %132 = arith.addf %131, %17 : vector<8x128xf32>
      %133 = math.tanh %132 : vector<8x128xf32>
      %134 = vector.shape_cast %119 : vector<8x1xi1> to vector<8x1xi1>
      %135 = vector.broadcast %134 : vector<8x1xi1> to vector<8x128xi1>
      %136 = arith.select %135, %133, %117 : vector<8x128xi1>, vector<8x128xf32>
      %c6_i32 = arith.constant 6 : i32
      %137 = vector.broadcast %c6_i32 : i32 to vector<8x1xi32>
      %138 = arith.cmpi slt, %137, %20 : vector<8x1xi32>
      %139 = arith.index_cast %c6_i32 : i32 to index
      %c0_46 = arith.constant 0 : index
      %c0_47 = arith.constant 0 : index
      %140 = vector.load %arg4[%139, %c0_46, %c0_47] : memref<8x8x128xf32, #tpu.memory_space<vmem>>, vector<1x8x128xf32>
      %141 = vector.shape_cast %140 : vector<1x8x128xf32> to vector<8x128xf32>
      %cst_48 = arith.constant dense<0.000000e+00> : vector<8x128xf32>
      %142 = tpu.matmul %136, %14, %cst_48 {dimension_numbers = #tpu.dot_dimension_numbers<[1], [0], [0], [1], [0, 0, 1, 1], [], []>} : vector<8x128xf32>, vector<128x128xf32>, vector<8x128xf32> -> vector<8x128xf32>
      %cst_49 = arith.constant dense<0.000000e+00> : vector<8x128xf32>
      %143 = tpu.matmul %129, %12, %cst_49 {dimension_numbers = #tpu.dot_dimension_numbers<[1], [0], [0], [1], [0, 0, 1, 1], [], []>} : vector<8x128xf32>, vector<128x128xf32>, vector<8x128xf32> -> vector<8x128xf32>
      %144 = arith.addf %141, %143 : vector<8x128xf32>
      %145 = math.tanh %144 : vector<8x128xf32>
      %146 = vector.shape_cast %138 : vector<8x1xi1> to vector<8x1xi1>
      %147 = vector.broadcast %146 : vector<8x1xi1> to vector<8x128xi1>
      %148 = arith.select %147, %145, %129 : vector<8x128xi1>, vector<8x128xf32>
      %cst_50 = arith.constant dense<0.000000e+00> : vector<8x128xf32>
      %149 = tpu.matmul %148, %13, %cst_50 {dimension_numbers = #tpu.dot_dimension_numbers<[1], [0], [0], [1], [0, 0, 1, 1], [], []>} : vector<8x128xf32>, vector<128x128xf32>, vector<8x128xf32> -> vector<8x128xf32>
      %150 = arith.addf %149, %142 : vector<8x128xf32>
      %151 = arith.addf %150, %17 : vector<8x128xf32>
      %152 = math.tanh %151 : vector<8x128xf32>
      %153 = vector.shape_cast %138 : vector<8x1xi1> to vector<8x1xi1>
      %154 = vector.broadcast %153 : vector<8x1xi1> to vector<8x128xi1>
      %155 = arith.select %154, %152, %136 : vector<8x128xi1>, vector<8x128xf32>
      %c7_i32 = arith.constant 7 : i32
      %156 = vector.broadcast %c7_i32 : i32 to vector<8x1xi32>
      %157 = arith.cmpi slt, %156, %20 : vector<8x1xi32>
      %158 = arith.index_cast %c7_i32 : i32 to index
      %c0_51 = arith.constant 0 : index
      %c0_52 = arith.constant 0 : index
      %159 = vector.load %arg4[%158, %c0_51, %c0_52] : memref<8x8x128xf32, #tpu.memory_space<vmem>>, vector<1x8x128xf32>
      %160 = vector.shape_cast %159 : vector<1x8x128xf32> to vector<8x128xf32>
      %cst_53 = arith.constant dense<0.000000e+00> : vector<8x128xf32>
      %161 = tpu.matmul %155, %14, %cst_53 {dimension_numbers = #tpu.dot_dimension_numbers<[1], [0], [0], [1], [0, 0, 1, 1], [], []>} : vector<8x128xf32>, vector<128x128xf32>, vector<8x128xf32> -> vector<8x128xf32>
      %cst_54 = arith.constant dense<0.000000e+00> : vector<8x128xf32>
      %162 = tpu.matmul %148, %12, %cst_54 {dimension_numbers = #tpu.dot_dimension_numbers<[1], [0], [0], [1], [0, 0, 1, 1], [], []>} : vector<8x128xf32>, vector<128x128xf32>, vector<8x128xf32> -> vector<8x128xf32>
      %163 = arith.addf %160, %162 : vector<8x128xf32>
      %164 = math.tanh %163 : vector<8x128xf32>
      %165 = vector.shape_cast %157 : vector<8x1xi1> to vector<8x1xi1>
      %166 = vector.broadcast %165 : vector<8x1xi1> to vector<8x128xi1>
      %167 = arith.select %166, %164, %148 : vector<8x128xi1>, vector<8x128xf32>
      %cst_55 = arith.constant dense<0.000000e+00> : vector<8x128xf32>
      %168 = tpu.matmul %167, %13, %cst_55 {dimension_numbers = #tpu.dot_dimension_numbers<[1], [0], [0], [1], [0, 0, 1, 1], [], []>} : vector<8x128xf32>, vector<128x128xf32>, vector<8x128xf32> -> vector<8x128xf32>
      %169 = arith.addf %168, %161 : vector<8x128xf32>
      %170 = arith.addf %169, %17 : vector<8x128xf32>
      %171 = math.tanh %170 : vector<8x128xf32>
      %172 = vector.shape_cast %157 : vector<8x1xi1> to vector<8x1xi1>
      %173 = vector.broadcast %172 : vector<8x1xi1> to vector<8x128xi1>
      %174 = arith.select %173, %171, %155 : vector<8x128xi1>, vector<8x128xf32>
      %c8_i32_56 = arith.constant 8 : i32
      %c0_57 = arith.constant 0 : index
      %c0_58 = arith.constant 0 : index
      %175 = vector.load %arg10[%c0_57, %c0_58] : memref<8x256xf32, #tpu.memory_space<vmem>>, vector<8x128xf32>
      tpu.vector_store %arg10[%c0_57, %c0_58], %167 {strides = array<i32>} : memref<8x256xf32, #tpu.memory_space<vmem>>, vector<8x128xf32>,
      %c0_59 = arith.constant 0 : index
      %c128_60 = arith.constant 128 : index
      %176 = vector.load %arg10[%c0_59, %c128_60] : memref<8x256xf32, #tpu.memory_space<vmem>>, vector<8x128xf32>
      tpu.vector_store %arg10[%c0_59, %c128_60], %174 {strides = array<i32>} : memref<8x256xf32, #tpu.memory_space<vmem>>, vector<8x128xf32>,
    } else {
    }
    %c0_i32_2 = arith.constant 0 : i32
    %9 = arith.cmpi eq, %arg1, %c0_i32_2 : i32
    %10 = arith.extui %9 : i1 to i32
    %c0_i32_3 = arith.constant 0 : i32
    %11 = arith.cmpi ne, %10, %c0_i32_3 : i32
    scf.if %11 {
      %c0 = arith.constant 0 : index
      %c128 = arith.constant 128 : index
      %12 = vector.load %arg10[%c0, %c128] : memref<8x256xf32, #tpu.memory_space<vmem>>, vector<8x128xf32>
      %c0_4 = arith.constant 0 : index
      %c0_5 = arith.constant 0 : index
      %13 = vector.load %arg9[%c0_4, %c0_5] : memref<8x128xf32, #tpu.memory_space<vmem>>, vector<8x128xf32>
      tpu.vector_store %arg9[%c0_4, %c0_5], %12 {strides = array<i32>} : memref<8x128xf32, #tpu.memory_space<vmem>>, vector<8x128xf32>,
    } else {
    }
    return
  }
  func.func @transform_0(%arg0: i32, %arg1: i32, %arg2: memref<1xi32, #tpu.memory_space<smem>>) -> (i32, i32) {
    %c0_i32 = arith.constant 0 : i32
    %c0_i32_0 = arith.constant 0 : i32
    return %arg0, %c0_i32 : i32, i32
  }
  func.func @transform_1(%arg0: i32, %arg1: i32, %arg2: memref<1xi32, #tpu.memory_space<smem>>) -> (i32, i32, i32) {
    %c0_i32 = arith.constant 0 : i32
    %c0_i32_0 = arith.constant 0 : i32
    return %arg1, %arg0, %c0_i32 : i32, i32, i32
  }
  func.func @transform_2(%arg0: i32, %arg1: i32, %arg2: memref<1xi32, #tpu.memory_space<smem>>) -> (i32, i32) {
    %c0_i32 = arith.constant 0 : i32
    %c0_i32_0 = arith.constant 0 : i32
    %c0_i32_1 = arith.constant 0 : i32
    return %c0_i32, %c0_i32_0 : i32, i32
  }
  func.func @transform_3(%arg0: i32, %arg1: i32, %arg2: memref<1xi32, #tpu.memory_space<smem>>) -> (i32, i32) {
    %c0_i32 = arith.constant 0 : i32
    %c0_i32_0 = arith.constant 0 : i32
    %c0_i32_1 = arith.constant 0 : i32
    return %c0_i32, %c0_i32_0 : i32, i32
  }
  func.func @transform_4(%arg0: i32, %arg1: i32, %arg2: memref<1xi32, #tpu.memory_space<smem>>) -> (i32, i32) {
    %c0_i32 = arith.constant 0 : i32
    %c0_i32_0 = arith.constant 0 : i32
    %c0_i32_1 = arith.constant 0 : i32
    return %c0_i32, %c0_i32_0 : i32, i32
  }
  func.func @transform_5(%arg0: i32, %arg1: i32, %arg2: memref<1xi32, #tpu.memory_space<smem>>) -> (i32, i32) {
    %c0_i32 = arith.constant 0 : i32
    %c0_i32_0 = arith.constant 0 : i32
    %c0_i32_1 = arith.constant 0 : i32
    return %c0_i32, %c0_i32_0 : i32, i32
  }
  func.func @transform_6(%arg0: i32, %arg1: i32, %arg2: memref<1xi32, #tpu.memory_space<smem>>) -> (i32, i32) {
    %c0_i32 = arith.constant 0 : i32
    %c0_i32_0 = arith.constant 0 : i32
    return %arg0, %c0_i32 : i32, i32
  }
}

</mosaic_0001>

<llo_original>
// kernel: tpu_custom_call.1
$region0: #{tpu_custom_call.1}
  #allocation0 [shape = 'u32[]', space=smem, size = 0x4, offset = 0x4, fixed_abs, tag = 'smem constant byte address 0x4 - core index']
  #allocation1 [shape = 'u32[144,128]{1,0:T(1,128)}', space=vmem, size = 0x12000, scoped, tag = 'internal scratch']
  #allocation2 [shape = 'f32[8,256]{1,0:T(8,128)}', space=vmem, size = 0x2000, scoped, tag = 'scratch operand']
  #allocation3 [shape = 's32[1]{0}', space=sflag, size = 0x4, scoped, tag = 'scoped memory for tpu_custom_call.1']
  #allocation4 [shape = 's32[1]{0:T(128)S(6)}', space=smem, size = 0x200, scoped, tag = 'prefetched SMEM operand 0']
  %s0 = inlined_call_operand.<no memory space> [shape: s32[1], index: 0, kind: input, shape index: {}]
  %s1 = inlined_call_operand.vmem [shape: s32[8,1], index: 1, kind: input, shape index: {}]
  %s2 = inlined_call_operand.hbm [shape: f32[8,8,128], index: 2, kind: input, shape index: {}]
  %s3 = inlined_call_operand.hbm [shape: f32[128,128], index: 3, kind: input, shape index: {}]
  %s4 = inlined_call_operand.hbm [shape: f32[128,128], index: 4, kind: input, shape index: {}]
  %s5 = inlined_call_operand.hbm [shape: f32[128,128], index: 5, kind: input, shape index: {}]
  %s6 = inlined_call_operand.vmem [shape: f32[1,128], index: 6, kind: input, shape index: {}]
  %s7 = inlined_call_operand.hbm [shape: f32[8,128], index: 7, kind: output, shape index: {}]
  %s8 = sld [smem:[#allocation0]]
  $region62: #{tpu_custom_call.1} parent=0
    _
  %s10 = ssub.s32 1, %s8
  %s11 = scalar_select 0, %s10, %s8
  %12 = sst [smem:[#allocation4]] %s0
  $region1: #{tpu_custom_call.1} parent=0
    #allocation5 [shape = 'u8[32768]{0}', space=vmem, size = 0x8000, scoped, tag = 'input window, operand 2, single buffered']
    #allocation6 [shape = 's32[1]{0}', space=sflag, size = 0x4, scoped, tag = 'scoped memory for tpu_custom_call.1']
    #allocation7 [shape = 's32[1]{0}', space=sflag, size = 0x4, scoped, tag = 'scoped memory for tpu_custom_call.1']
    #allocation8 [shape = 'u8[65536]{0}', space=vmem, size = 0x10000, scoped, tag = 'input window, operand 3, single buffered']
    #allocation9 [shape = 's32[1]{0}', space=sflag, size = 0x4, scoped, tag = 'scoped memory for tpu_custom_call.1']
    #allocation10 [shape = 'u8[65536]{0}', space=vmem, size = 0x10000, scoped, tag = 'input window, operand 4, single buffered']
    #allocation11 [shape = 'u8[65536]{0}', space=vmem, size = 0x10000, scoped, tag = 'input window, operand 5, single buffered']
    #allocation12 [shape = 's32[1]{0}', space=sflag, size = 0x4, scoped, tag = 'scoped memory for tpu_custom_call.1']
    #allocation13 [shape = 'u8[4096]{0}', space=vmem, size = 0x1000, scoped, tag = 'output window, operand 0, single buffered']
    %13 = vsyncpa [#allocation6], 0
    %14 = vsyncpa [#allocation9], 0
    %15 = vsyncpa [#allocation12], 0
    %16 = vsyncpa [#allocation7], 0
    // Predicated region
    $region2: #{tpu_custom_call.1} parent=1 // pred_check
      _
    $region3: #{tpu_custom_call.1} parent=1 // pred_check_branch
      %18 = sbr.rel (0) target = $region5
    $region4: #{tpu_custom_call.1} parent=1 // pred_region
      _
    $region5: #{tpu_custom_call.1} parent=1 // pred_fallthru
      _
    // Predicated region
    $region6: #{tpu_custom_call.1} parent=1 // pred_check
      _
    $region7: #{tpu_custom_call.1} parent=1 // pred_check_branch
      %20 = sbr.rel (0) target = $region9
    $region8: #{tpu_custom_call.1} parent=1 // pred_region
      %s22 = ssub.s32 1024, 1024
      %23 = vsyncadd [#allocation6], %s22
      %s24 = sshll.u32 [#allocation5], 4
      %s25 = int_to_ptr.vmem [resolvable:$true] %s24
      %30 = dma.hbm_to_vmem [thread:$0]  %s2, 1024, %s25, [#allocation6], 128, 128, 8
    $region9: #{tpu_custom_call.1} parent=1 // pred_fallthru
      _
    // Predicated region
    $region10: #{tpu_custom_call.1} parent=1 // pred_check
      _
    $region11: #{tpu_custom_call.1} parent=1 // pred_check_branch
      %32 = sbr.rel (0) target = $region13
    $region12: #{tpu_custom_call.1} parent=1 // pred_region
      %s34 = ssub.s32 2048, 2048
      %35 = vsyncadd [#allocation9], %s34
      %s36 = sshll.u32 [#allocation8], 4
      %s37 = int_to_ptr.vmem [resolvable:$true] %s36
      %42 = dma.hbm_to_vmem [thread:$0]  %s3, 2048, %s37, [#allocation9], 128, 128, 8
    $region13: #{tpu_custom_call.1} parent=1 // pred_fallthru
      _
    // Predicated region
    $region14: #{tpu_custom_call.1} parent=1 // pred_check
      _
    $region15: #{tpu_custom_call.1} parent=1 // pred_check_branch
      %44 = sbr.rel (0) target = $region17
    $region16: #{tpu_custom_call.1} parent=1 // pred_region
      %s46 = ssub.s32 2048, 2048
      %47 = vsyncadd [#allocation9], %s46
      %s48 = sshll.u32 [#allocation10], 4
      %s49 = int_to_ptr.vmem [resolvable:$true] %s48
      %54 = dma.hbm_to_vmem [thread:$0]  %s4, 2048, %s49, [#allocation9], 128, 128, 8
    $region17: #{tpu_custom_call.1} parent=1 // pred_fallthru
      _
    // Predicated region
    $region18: #{tpu_custom_call.1} parent=1 // pred_check
      _
    $region19: #{tpu_custom_call.1} parent=1 // pred_check_branch
      %56 = sbr.rel (0) target = $region21
    $region20: #{tpu_custom_call.1} parent=1 // pred_region
      %s58 = ssub.s32 2048, 2048
      %59 = vsyncadd [#allocation12], %s58
      %s60 = sshll.u32 [#allocation11], 4
      %s61 = int_to_ptr.vmem [resolvable:$true] %s60
      %66 = dma.hbm_to_vmem [thread:$0]  %s5, 2048, %s61, [#allocation12], 128, 128, 8
    $region21: #{tpu_custom_call.1} parent=1 // pred_fallthru
      _
    // Predicated region
    $region22: #{tpu_custom_call.1} parent=1 // pred_check
      _
    $region23: #{tpu_custom_call.1} parent=1 // pred_check_branch
      %68 = sbr.rel (0) target = $region25
    $region24: #{tpu_custom_call.1} parent=1 // pred_region
      _
    $region25: #{tpu_custom_call.1} parent=1 // pred_fallthru
      _
    // Predicated region
    $region26: #{tpu_custom_call.1} parent=1 // pred_check
      _
    $region27: #{tpu_custom_call.1} parent=1 // pred_check_branch
      %70 = sbr.rel (0) target = $region29
    $region28: #{tpu_custom_call.1} parent=1 // pred_region
      %71 = dma.done [#allocation6], 1024
    $region29: #{tpu_custom_call.1} parent=1 // pred_fallthru
      _
    // Predicated region
    $region30: #{tpu_custom_call.1} parent=1 // pred_check
      _
    $region31: #{tpu_custom_call.1} parent=1 // pred_check_branch
      %73 = sbr.rel (0) target = $region33
    $region32: #{tpu_custom_call.1} parent=1 // pred_region
      %74 = dma.done [#allocation9], 2048
    $region33: #{tpu_custom_call.1} parent=1 // pred_fallthru
      _
    // Predicated region
    $region34: #{tpu_custom_call.1} parent=1 // pred_check
      _
    $region35: #{tpu_custom_call.1} parent=1 // pred_check_branch
      %76 = sbr.rel (0) target = $region37
    $region36: #{tpu_custom_call.1} parent=1 // pred_region
      %77 = dma.done [#allocation9], 2048
    $region37: #{tpu_custom_call.1} parent=1 // pred_fallthru
      _
    // Predicated region
    $region38: #{tpu_custom_call.1} parent=1 // pred_check
      _
    $region39: #{tpu_custom_call.1} parent=1 // pred_check_branch
      %79 = sbr.rel (0) target = $region41
    $region40: #{tpu_custom_call.1} parent=1 // pred_region
      %80 = dma.done [#allocation12], 2048
    $region41: #{tpu_custom_call.1} parent=1 // pred_fallthru
      _
    %p81 = scmp.eq.s32.totalorder 0, 0
    // Predicated region
    $region42: #{tpu_custom_call.1} parent=1 // pred_check
      %p82 = pneg %p81
    $region43: #{tpu_custom_call.1} parent=1 // pred_check_branch
      %84 = sbr.rel (%p82) target = $region45
    $region44: #{tpu_custom_call.1} parent=1 // pred_region
      %85 = vst [vmem:[#allocation2] sm:$0xff] 0.0
      %86 = vst [vmem:[#allocation2 + $0x8] sm:$0xff] 0.0
    $region45: #{tpu_custom_call.1} parent=1 // pred_fallthru
      _
    %s87 = smul.u32 0, 8
    %s88 = sld [smem:[#allocation4]]
    %p89 = scmp.lt.s32.totalorder %s87, %s88
    // Predicated region
    $region46: #{tpu_custom_call.1} parent=1 // pred_check
      %p90 = pneg %p89
    $region47: #{tpu_custom_call.1} parent=1 // pred_check_branch
      %92 = sbr.rel (%p90) target = $region49
    $region48: #{tpu_custom_call.1} parent=1 // pred_region
      %v93 = vld [vmem:[#allocation8] sm:$0xff]
      %v94 = vld [vmem:[#allocation8 + $0x8] sm:$0xff]
      %v95 = vld [vmem:[#allocation8 + $0x10] sm:$0xff]
      %v96 = vld [vmem:[#allocation8 + $0x18] sm:$0xff]
      %v97 = vld [vmem:[#allocation8 + $0x20] sm:$0xff]
      %v98 = vld [vmem:[#allocation8 + $0x28] sm:$0xff]
      %v99 = vld [vmem:[#allocation8 + $0x30] sm:$0xff]
      %v100 = vld [vmem:[#allocation8 + $0x38] sm:$0xff]
      %v101 = vld [vmem:[#allocation8 + $0x40] sm:$0xff]
      %v102 = vld [vmem:[#allocation8 + $0x48] sm:$0xff]
      %v103 = vld [vmem:[#allocation8 + $0x50] sm:$0xff]
      %v104 = vld [vmem:[#allocation8 + $0x58] sm:$0xff]
      %v105 = vld [vmem:[#allocation8 + $0x60] sm:$0xff]
      %v106 = vld [vmem:[#allocation8 + $0x68] sm:$0xff]
      %v107 = vld [vmem:[#allocation8 + $0x70] sm:$0xff]
      %v108 = vld [vmem:[#allocation8 + $0x78] sm:$0xff]
      %v109 = vld [vmem:[#allocation10] sm:$0xff]
      %v110 = vld [vmem:[#allocation10 + $0x8] sm:$0xff]
      %v111 = vld [vmem:[#allocation10 + $0x10] sm:$0xff]
      %v112 = vld [vmem:[#allocation10 + $0x18] sm:$0xff]
      %v113 = vld [vmem:[#allocation10 + $0x20] sm:$0xff]
      %v114 = vld [vmem:[#allocation10 + $0x28] sm:$0xff]
      %v115 = vld [vmem:[#allocation10 + $0x30] sm:$0xff]
      %v116 = vld [vmem:[#allocation10 + $0x38] sm:$0xff]
      %v117 = vld [vmem:[#allocation10 + $0x40] sm:$0xff]
      %v118 = vld [vmem:[#allocation10 + $0x48] sm:$0xff]
      %v119 = vld [vmem:[#allocation10 + $0x50] sm:$0xff]
      %v120 = vld [vmem:[#allocation10 + $0x58] sm:$0xff]
      %v121 = vld [vmem:[#allocation10 + $0x60] sm:$0xff]
      %v122 = vld [vmem:[#allocation10 + $0x68] sm:$0xff]
      %v123 = vld [vmem:[#allocation10 + $0x70] sm:$0xff]
      %v124 = vld [vmem:[#allocation10 + $0x78] sm:$0xff]
      %v125 = vld [vmem:[#allocation11] sm:$0xff]
      %v126 = vld [vmem:[#allocation11 + $0x8] sm:$0xff]
      %v127 = vld [vmem:[#allocation11 + $0x10] sm:$0xff]
      %v128 = vld [vmem:[#allocation11 + $0x18] sm:$0xff]
      %v129 = vld [vmem:[#allocation11 + $0x20] sm:$0xff]
      %v130 = vld [vmem:[#allocation11 + $0x28] sm:$0xff]
      %v131 = vld [vmem:[#allocation11 + $0x30] sm:$0xff]
      %v132 = vld [vmem:[#allocation11 + $0x38] sm:$0xff]
      %v133 = vld [vmem:[#allocation11 + $0x40] sm:$0xff]
      %v134 = vld [vmem:[#allocation11 + $0x48] sm:$0xff]
      %v135 = vld [vmem:[#allocation11 + $0x50] sm:$0xff]
      %v136 = vld [vmem:[#allocation11 + $0x58] sm:$0xff]
      %v137 = vld [vmem:[#allocation11 + $0x60] sm:$0xff]
      %v138 = vld [vmem:[#allocation11 + $0x68] sm:$0xff]
      %v139 = vld [vmem:[#allocation11 + $0x70] sm:$0xff]
      %v140 = vld [vmem:[#allocation11 + $0x78] sm:$0xff]
      %v141 = vld [vmem:[%s6] sm:$0x1]
      %v143 = vlaneseq
      %v144 = vshrl.u32 %v143, 7
      %v145 = vsub.s32 0, %v144
      %v146 = vrot.slane %v141, %v145
      %v148 = vld [vmem:[%s1] sm:$0xff]
      %v149 = vstv %s87
      %v150 = vsub.s32 %v148, %v149
      %v151 = vld [vmem:[#allocation2] sm:$0xff]
      %v152 = vld [vmem:[#allocation2 + $0x8] sm:$0xff]
      %vm153 = vcmp.gt.s32.totalorder %v150, 0
      %v154 = vld [vmem:[#allocation5] sm:$0xff]
      %155 = vmatprep.subr.mxu0 0.0
      %156 = vmatpush1.msra.mxu0 %v125
      %157 = vmatprep.subr.mxu0 0.0
      %158 = vmatpush1.msra.mxu0 %v126
      %159 = vmatprep.subr.mxu0 0.0
      %160 = vmatpush1.msra.mxu0 %v127
      %161 = vmatprep.subr.mxu0 0.0
      %162 = vmatpush1.msra.mxu0 %v128
      %163 = vmatprep.subr.mxu0 0.0
      %164 = vmatpush1.msra.mxu0 %v129
      %165 = vmatprep.subr.mxu0 0.0
      %166 = vmatpush1.msra.mxu0 %v130
      %167 = vmatprep.subr.mxu0 0.0
      %168 = vmatpush1.msra.mxu0 %v131
      %169 = vmatprep.subr.mxu0 0.0
      %170 = vmatpush1.msra.mxu0 %v132
      %171 = vmatprep.subr.mxu0 0.0
      %172 = vmatpush1.msra.mxu0 %v133
      %173 = vmatprep.subr.mxu0 0.0
      %174 = vmatpush1.msra.mxu0 %v134
      %175 = vmatprep.subr.mxu0 0.0
      %176 = vmatpush1.msra.mxu0 %v135
      %177 = vmatprep.subr.mxu0 0.0
      %178 = vmatpush1.msra.mxu0 %v136
      %179 = vmatprep.subr.mxu0 0.0
      %180 = vmatpush1.msra.mxu0 %v137
      %181 = vmatprep.subr.mxu0 0.0
      %182 = vmatpush1.msra.mxu0 %v138
      %183 = vmatprep.subr.mxu0 0.0
      %184 = vmatpush1.msra.mxu0 %v139
      %185 = vmatprep.subr.mxu0 0.0
      %186 = vmatpush1.msra.mxu0 %v140
      %187 = vmatprep.subr.mxu0 0.0
      %188 = vmatpush1.msra.mxu0 0.0
      %189 = vmatprep.subr.mxu0 0.0
      %190 = vmatpush1.msra.mxu0 0.0
      %191 = vmatprep.subr.mxu0 0.0
      %192 = vmatpush1.msra.mxu0 0.0
      %193 = vmatprep.subr.mxu0 0.0
      %194 = vmatpush1.msra.mxu0 0.0
      %195 = vmatprep.subr.mxu0 0.0
      %196 = vmatpush1.msra.mxu0 0.0
      %197 = vmatprep.subr.mxu0 0.0
      %198 = vmatpush1.msra.mxu0 0.0
      %199 = vmatprep.subr.mxu0 0.0
      %200 = vmatpush1.msra.mxu0 0.0
      %201 = vmatprep.subr.mxu0 0.0
      %202 = vmatpush1.msra.mxu0 0.0
      %203 = vmatprep.subr.mxu0 0.0
      %204 = vmatpush1.msra.mxu0 0.0
      %205 = vmatprep.subr.mxu0 0.0
      %206 = vmatpush1.msra.mxu0 0.0
      %207 = vmatprep.subr.mxu0 0.0
      %208 = vmatpush1.msra.mxu0 0.0
      %209 = vmatprep.subr.mxu0 0.0
      %210 = vmatpush1.msra.mxu0 0.0
      %211 = vmatprep.subr.mxu0 0.0
      %212 = vmatpush1.msra.mxu0 0.0
      %213 = vmatprep.subr.mxu0 0.0
      %214 = vmatpush1.msra.mxu0 0.0
      %215 = vmatprep.subr.mxu0 0.0
      %216 = vmatpush1.msra.mxu0 0.0
      %217 = vmatprep.subr.mxu0 0.0
      %218 = vmatpush1.msra.mxu0 0.0
      %219 = vmatprep.mubr.f32.mxu0 0.0
      %220 = vmatmul.mubr.f32.gmra.mrb[0].mxu0 %v152
      %v221 = vpop.f32.mrb[0].mxu0
      %v222 = vadd.f32 0.0, %v221
      %v223 = vpop.f32.mrb[0].mxu0
      %224 = vdwg.mxu0
      %225 = vmatprep.subr.mxu0 0.0
      %226 = vmatpush1.msra.mxu0 %v93
      %227 = vmatprep.subr.mxu0 0.0
      %228 = vmatpush1.msra.mxu0 %v94
      %229 = vmatprep.subr.mxu0 0.0
      %230 = vmatpush1.msra.mxu0 %v95
      %231 = vmatprep.subr.mxu0 0.0
      %232 = vmatpush1.msra.mxu0 %v96
      %233 = vmatprep.subr.mxu0 0.0
      %234 = vmatpush1.msra.mxu0 %v97
      %235 = vmatprep.subr.mxu0 0.0
      %236 = vmatpush1.msra.mxu0 %v98
      %237 = vmatprep.subr.mxu0 0.0
      %238 = vmatpush1.msra.mxu0 %v99
      %239 = vmatprep.subr.mxu0 0.0
      %240 = vmatpush1.msra.mxu0 %v100
      %241 = vmatprep.subr.mxu0 0.0
      %242 = vmatpush1.msra.mxu0 %v101
      %243 = vmatprep.subr.mxu0 0.0
      %244 = vmatpush1.msra.mxu0 %v102
      %245 = vmatprep.subr.mxu0 0.0
      %246 = vmatpush1.msra.mxu0 %v103
      %247 = vmatprep.subr.mxu0 0.0
      %248 = vmatpush1.msra.mxu0 %v104
      %249 = vmatprep.subr.mxu0 0.0
      %250 = vmatpush1.msra.mxu0 %v105
      %251 = vmatprep.subr.mxu0 0.0
      %252 = vmatpush1.msra.mxu0 %v106
      %253 = vmatprep.subr.mxu0 0.0
      %254 = vmatpush1.msra.mxu0 %v107
      %255 = vmatprep.subr.mxu0 0.0
      %256 = vmatpush1.msra.mxu0 %v108
      %257 = vmatprep.subr.mxu0 0.0
      %258 = vmatpush1.msra.mxu0 0.0
      %259 = vmatprep.subr.mxu0 0.0
      %260 = vmatpush1.msra.mxu0 0.0
      %261 = vmatprep.subr.mxu0 0.0
      %262 = vmatpush1.msra.mxu0 0.0
      %263 = vmatprep.subr.mxu0 0.0
      %264 = vmatpush1.msra.mxu0 0.0
      %265 = vmatprep.subr.mxu0 0.0
      %266 = vmatpush1.msra.mxu0 0.0
      %267 = vmatprep.subr.mxu0 0.0
      %268 = vmatpush1.msra.mxu0 0.0
      %269 = vmatprep.subr.mxu0 0.0
      %270 = vmatpush1.msra.mxu0 0.0
      %271 = vmatprep.subr.mxu0 0.0
      %272 = vmatpush1.msra.mxu0 0.0
      %273 = vmatprep.subr.mxu0 0.0
      %274 = vmatpush1.msra.mxu0 0.0
      %275 = vmatprep.subr.mxu0 0.0
      %276 = vmatpush1.msra.mxu0 0.0
      %277 = vmatprep.subr.mxu0 0.0
      %278 = vmatpush1.msra.mxu0 0.0
      %279 = vmatprep.subr.mxu0 0.0
      %280 = vmatpush1.msra.mxu0 0.0
      %281 = vmatprep.subr.mxu0 0.0
      %282 = vmatpush1.msra.mxu0 0.0
      %283 = vmatprep.subr.mxu0 0.0
      %284 = vmatpush1.msra.mxu0 0.0
      %285 = vmatprep.subr.mxu0 0.0
      %286 = vmatpush1.msra.mxu0 0.0
      %287 = vmatprep.subr.mxu0 0.0
      %288 = vmatpush1.msra.mxu0 0.0
      %289 = vmatprep.mubr.f32.mxu0 0.0
      %290 = vmatmul.mubr.f32.gmra.mrb[0].mxu0 %v151
      %v291 = vpop.f32.mrb[0].mxu0
      %v292 = vadd.f32 0.0, %v291
      %v293 = vpop.f32.mrb[0].mxu0
      %294 = vdwg.mxu0
      %v295 = vadd.f32 %v154, %v292
      %v296 = vtanh.pop %v295
      %v297 = vsel %vm153, 1, 0
      %298 = vset.pattern.permute.xlu0 0
      %299 = vperm.xlu0 %298, %v297
      %v300 = vpop.permute.xlu0 %299
      %vm301 = vcmp.eq.s32.totalorder %v300, 1
      %v302 = vsel %vm301, %v296, %v151
      %303 = vmatprep.subr.mxu0 0.0
      %304 = vmatpush1.msra.mxu0 %v109
      %305 = vmatprep.subr.mxu0 0.0
      %306 = vmatpush1.msra.mxu0 %v110
      %307 = vmatprep.subr.mxu0 0.0
      %308 = vmatpush1.msra.mxu0 %v111
      %309 = vmatprep.subr.mxu0 0.0
      %310 = vmatpush1.msra.mxu0 %v112
      %311 = vmatprep.subr.mxu0 0.0
      %312 = vmatpush1.msra.mxu0 %v113
      %313 = vmatprep.subr.mxu0 0.0
      %314 = vmatpush1.msra.mxu0 %v114
      %315 = vmatprep.subr.mxu0 0.0
      %316 = vmatpush1.msra.mxu0 %v115
      %317 = vmatprep.subr.mxu0 0.0
      %318 = vmatpush1.msra.mxu0 %v116
      %319 = vmatprep.subr.mxu0 0.0
      %320 = vmatpush1.msra.mxu0 %v117
      %321 = vmatprep.subr.mxu0 0.0
      %322 = vmatpush1.msra.mxu0 %v118
      %323 = vmatprep.subr.mxu0 0.0
      %324 = vmatpush1.msra.mxu0 %v119
      %325 = vmatprep.subr.mxu0 0.0
      %326 = vmatpush1.msra.mxu0 %v120
      %327 = vmatprep.subr.mxu0 0.0
      %328 = vmatpush1.msra.mxu0 %v121
      %329 = vmatprep.subr.mxu0 0.0
      %330 = vmatpush1.msra.mxu0 %v122
      %331 = vmatprep.subr.mxu0 0.0
      %332 = vmatpush1.msra.mxu0 %v123
      %333 = vmatprep.subr.mxu0 0.0
      %334 = vmatpush1.msra.mxu0 %v124
      %335 = vmatprep.subr.mxu0 0.0
      %336 = vmatpush1.msra.mxu0 0.0
      %337 = vmatprep.subr.mxu0 0.0
      %338 = vmatpush1.msra.mxu0 0.0
      %339 = vmatprep.subr.mxu0 0.0
      %340 = vmatpush1.msra.mxu0 0.0
      %341 = vmatprep.subr.mxu0 0.0
      %342 = vmatpush1.msra.mxu0 0.0
      %343 = vmatprep.subr.mxu0 0.0
      %344 = vmatpush1.msra.mxu0 0.0
      %345 = vmatprep.subr.mxu0 0.0
      %346 = vmatpush1.msra.mxu0 0.0
      %347 = vmatprep.subr.mxu0 0.0
      %348 = vmatpush1.msra.mxu0 0.0
      %349 = vmatprep.subr.mxu0 0.0
      %350 = vmatpush1.msra.mxu0 0.0
      %351 = vmatprep.subr.mxu0 0.0
      %352 = vmatpush1.msra.mxu0 0.0
      %353 = vmatprep.subr.mxu0 0.0
      %354 = vmatpush1.msra.mxu0 0.0
      %355 = vmatprep.subr.mxu0 0.0
      %356 = vmatpush1.msra.mxu0 0.0
      %357 = vmatprep.subr.mxu0 0.0
      %358 = vmatpush1.msra.mxu0 0.0
      %359 = vmatprep.subr.mxu0 0.0
      %360 = vmatpush1.msra.mxu0 0.0
      %361 = vmatprep.subr.mxu0 0.0
      %362 = vmatpush1.msra.mxu0 0.0
      %363 = vmatprep.subr.mxu0 0.0
      %364 = vmatpush1.msra.mxu0 0.0
      %365 = vmatprep.subr.mxu0 0.0
      %366 = vmatpush1.msra.mxu0 0.0
      %367 = vmatprep.mubr.f32.mxu0 0.0
      %368 = vmatmul.mubr.f32.gmra.mrb[0].mxu0 %v302
      %v369 = vpop.f32.mrb[0].mxu0
      %v370 = vadd.f32 %v222, %v369
      %v371 = vpop.f32.mrb[0].mxu0
      %372 = vdwg.mxu0
      %v373 = vadd.f32 %v370, %v146
      %v374 = vtanh.pop %v373
      %v375 = vsel %vm301, %v374, %v152
      %vm376 = vcmp.gt.s32.totalorder %v150, 1
      %s377 = scalar_lea.vmem [#allocation5], 8
      %v378 = vld [vmem:[%s377] sm:$0xff]
      %379 = vmatprep.subr.mxu0 0.0
      %380 = vmatpush1.msra.mxu0 %v125
      %381 = vmatprep.subr.mxu0 0.0
      %382 = vmatpush1.msra.mxu0 %v126
      %383 = vmatprep.subr.mxu0 0.0
      %384 = vmatpush1.msra.mxu0 %v127
      %385 = vmatprep.subr.mxu0 0.0
      %386 = vmatpush1.msra.mxu0 %v128
      %387 = vmatprep.subr.mxu0 0.0
      %388 = vmatpush1.msra.mxu0 %v129
      %389 = vmatprep.subr.mxu0 0.0
      %390 = vmatpush1.msra.mxu0 %v130
      %391 = vmatprep.subr.mxu0 0.0
      %392 = vmatpush1.msra.mxu0 %v131
      %393 = vmatprep.subr.mxu0 0.0
      %394 = vmatpush1.msra.mxu0 %v132
      %395 = vmatprep.subr.mxu0 0.0
      %396 = vmatpush1.msra.mxu0 %v133
      %397 = vmatprep.subr.mxu0 0.0
      %398 = vmatpush1.msra.mxu0 %v134
      %399 = vmatprep.subr.mxu0 0.0
      %400 = vmatpush1.msra.mxu0 %v135
      %401 = vmatprep.subr.mxu0 0.0
      %402 = vmatpush1.msra.mxu0 %v136
      %403 = vmatprep.subr.mxu0 0.0
      %404 = vmatpush1.msra.mxu0 %v137
      %405 = vmatprep.subr.mxu0 0.0
      %406 = vmatpush1.msra.mxu0 %v138
      %407 = vmatprep.subr.mxu0 0.0
      %408 = vmatpush1.msra.mxu0 %v139
      %409 = vmatprep.subr.mxu0 0.0
      %410 = vmatpush1.msra.mxu0 %v140
      %411 = vmatprep.subr.mxu0 0.0
      %412 = vmatpush1.msra.mxu0 0.0
      %413 = vmatprep.subr.mxu0 0.0
      %414 = vmatpush1.msra.mxu0 0.0
      %415 = vmatprep.subr.mxu0 0.0
      %416 = vmatpush1.msra.mxu0 0.0
      %417 = vmatprep.subr.mxu0 0.0
      %418 = vmatpush1.msra.mxu0 0.0
      %419 = vmatprep.subr.mxu0 0.0
      %420 = vmatpush1.msra.mxu0 0.0
      %421 = vmatprep.subr.mxu0 0.0
      %422 = vmatpush1.msra.mxu0 0.0
      %423 = vmatprep.subr.mxu0 0.0
      %424 = vmatpush1.msra.mxu0 0.0
      %425 = vmatprep.subr.mxu0 0.0
      %426 = vmatpush1.msra.mxu0 0.0
      %427 = vmatprep.subr.mxu0 0.0
      %428 = vmatpush1.msra.mxu0 0.0
      %429 = vmatprep.subr.mxu0 0.0
      %430 = vmatpush1.msra.mxu0 0.0
      %431 = vmatprep.subr.mxu0 0.0
      %432 = vmatpush1.msra.mxu0 0.0
      %433 = vmatprep.subr.mxu0 0.0
      %434 = vmatpush1.msra.mxu0 0.0
      %435 = vmatprep.subr.mxu0 0.0
      %436 = vmatpush1.msra.mxu0 0.0
      %437 = vmatprep.subr.mxu0 0.0
      %438 = vmatpush1.msra.mxu0 0.0
      %439 = vmatprep.subr.mxu0 0.0
      %440 = vmatpush1.msra.mxu0 0.0
      %441 = vmatprep.subr.mxu0 0.0
      %442 = vmatpush1.msra.mxu0 0.0
      %443 = vmatprep.mubr.f32.mxu0 0.0
      %444 = vmatmul.mubr.f32.gmra.mrb[0].mxu0 %v375
      %v445 = vpop.f32.mrb[0].mxu0
      %v446 = vadd.f32 0.0, %v445
      %v447 = vpop.f32.mrb[0].mxu0
      %448 = vdwg.mxu0
      %449 = vmatprep.subr.mxu0 0.0
      %450 = vmatpush1.msra.mxu0 %v93
      %451 = vmatprep.subr.mxu0 0.0
      %452 = vmatpush1.msra.mxu0 %v94
      %453 = vmatprep.subr.mxu0 0.0
      %454 = vmatpush1.msra.mxu0 %v95
      %455 = vmatprep.subr.mxu0 0.0
      %456 = vmatpush1.msra.mxu0 %v96
      %457 = vmatprep.subr.mxu0 0.0
      %458 = vmatpush1.msra.mxu0 %v97
      %459 = vmatprep.subr.mxu0 0.0
      %460 = vmatpush1.msra.mxu0 %v98
      %461 = vmatprep.subr.mxu0 0.0
      %462 = vmatpush1.msra.mxu0 %v99
      %463 = vmatprep.subr.mxu0 0.0
      %464 = vmatpush1.msra.mxu0 %v100
      %465 = vmatprep.subr.mxu0 0.0
      %466 = vmatpush1.msra.mxu0 %v101
      %467 = vmatprep.subr.mxu0 0.0
      %468 = vmatpush1.msra.mxu0 %v102
      %469 = vmatprep.subr.mxu0 0.0
      %470 = vmatpush1.msra.mxu0 %v103
      %471 = vmatprep.subr.mxu0 0.0
      %472 = vmatpush1.msra.mxu0 %v104
      %473 = vmatprep.subr.mxu0 0.0
      %474 = vmatpush1.msra.mxu0 %v105
      %475 = vmatprep.subr.mxu0 0.0
      %476 = vmatpush1.msra.mxu0 %v106
      %477 = vmatprep.subr.mxu0 0.0
      %478 = vmatpush1.msra.mxu0 %v107
      %479 = vmatprep.subr.mxu0 0.0
      %480 = vmatpush1.msra.mxu0 %v108
      %481 = vmatprep.subr.mxu0 0.0
      %482 = vmatpush1.msra.mxu0 0.0
      %483 = vmatprep.subr.mxu0 0.0
      %484 = vmatpush1.msra.mxu0 0.0
      %485 = vmatprep.subr.mxu0 0.0
      %486 = vmatpush1.msra.mxu0 0.0
      %487 = vmatprep.subr.mxu0 0.0
      %488 = vmatpush1.msra.mxu0 0.0
      %489 = vmatprep.subr.mxu0 0.0
      %490 = vmatpush1.msra.mxu0 0.0
      %491 = vmatprep.subr.mxu0 0.0
      %492 = vmatpush1.msra.mxu0 0.0
      %493 = vmatprep.subr.mxu0 0.0
      %494 = vmatpush1.msra.mxu0 0.0
      %495 = vmatprep.subr.mxu0 0.0
      %496 = vmatpush1.msra.mxu0 0.0
      %497 = vmatprep.subr.mxu0 0.0
      %498 = vmatpush1.msra.mxu0 0.0
      %499 = vmatprep.subr.mxu0 0.0
      %500 = vmatpush1.msra.mxu0 0.0
      %501 = vmatprep.subr.mxu0 0.0
      %502 = vmatpush1.msra.mxu0 0.0
      %503 = vmatprep.subr.mxu0 0.0
      %504 = vmatpush1.msra.mxu0 0.0
      %505 = vmatprep.subr.mxu0 0.0
      %506 = vmatpush1.msra.mxu0 0.0
      %507 = vmatprep.subr.mxu0 0.0
      %508 = vmatpush1.msra.mxu0 0.0
      %509 = vmatprep.subr.mxu0 0.0
      %510 = vmatpush1.msra.mxu0 0.0
      %511 = vmatprep.subr.mxu0 0.0
      %512 = vmatpush1.msra.mxu0 0.0
      %513 = vmatprep.mubr.f32.mxu0 0.0
      %514 = vmatmul.mubr.f32.gmra.mrb[0].mxu0 %v302
      %v515 = vpop.f32.mrb[0].mxu0
      %v516 = vadd.f32 0.0, %v515
      %v517 = vpop.f32.mrb[0].mxu0
      %518 = vdwg.mxu0
      %v519 = vadd.f32 %v378, %v516
      %v520 = vtanh.pop %v519
      %v521 = vsel %vm376, 1, 0
      %522 = vset.pattern.permute.xlu0 0
      %523 = vperm.xlu0 %522, %v521
      %v524 = vpop.permute.xlu0 %523
      %vm525 = vcmp.eq.s32.totalorder %v524, 1
      %v526 = vsel %vm525, %v520, %v302
      %527 = vmatprep.subr.mxu0 0.0
      %528 = vmatpush1.msra.mxu0 %v109
      %529 = vmatprep.subr.mxu0 0.0
      %530 = vmatpush1.msra.mxu0 %v110
      %531 = vmatprep.subr.mxu0 0.0
      %532 = vmatpush1.msra.mxu0 %v111
      %533 = vmatprep.subr.mxu0 0.0
      %534 = vmatpush1.msra.mxu0 %v112
      %535 = vmatprep.subr.mxu0 0.0
      %536 = vmatpush1.msra.mxu0 %v113
      %537 = vmatprep.subr.mxu0 0.0
      %538 = vmatpush1.msra.mxu0 %v114
      %539 = vmatprep.subr.mxu0 0.0
      %540 = vmatpush1.msra.mxu0 %v115
      %541 = vmatprep.subr.mxu0 0.0
      %542 = vmatpush1.msra.mxu0 %v116
      %543 = vmatprep.subr.mxu0 0.0
      %544 = vmatpush1.msra.mxu0 %v117
      %545 = vmatprep.subr.mxu0 0.0
      %546 = vmatpush1.msra.mxu0 %v118
      %547 = vmatprep.subr.mxu0 0.0
      %548 = vmatpush1.msra.mxu0 %v119
      %549 = vmatprep.subr.mxu0 0.0
      %550 = vmatpush1.msra.mxu0 %v120
      %551 = vmatprep.subr.mxu0 0.0
      %552 = vmatpush1.msra.mxu0 %v121
      %553 = vmatprep.subr.mxu0 0.0
      %554 = vmatpush1.msra.mxu0 %v122
      %555 = vmatprep.subr.mxu0 0.0
      %556 = vmatpush1.msra.mxu0 %v123
      %557 = vmatprep.subr.mxu0 0.0
      %558 = vmatpush1.msra.mxu0 %v124
      %559 = vmatprep.subr.mxu0 0.0
      %560 = vmatpush1.msra.mxu0 0.0
      %561 = vmatprep.subr.mxu0 0.0
      %562 = vmatpush1.msra.mxu0 0.0
      %563 = vmatprep.subr.mxu0 0.0
      %564 = vmatpush1.msra.mxu0 0.0
      %565 = vmatprep.subr.mxu0 0.0
      %566 = vmatpush1.msra.mxu0 0.0
      %567 = vmatprep.subr.mxu0 0.0
      %568 = vmatpush1.msra.mxu0 0.0
      %569 = vmatprep.subr.mxu0 0.0
      %570 = vmatpush1.msra.mxu0 0.0
      %571 = vmatprep.subr.mxu0 0.0
      %572 = vmatpush1.msra.mxu0 0.0
      %573 = vmatprep.subr.mxu0 0.0
      %574 = vmatpush1.msra.mxu0 0.0
      %575 = vmatprep.subr.mxu0 0.0
      %576 = vmatpush1.msra.mxu0 0.0
      %577 = vmatprep.subr.mxu0 0.0
      %578 = vmatpush1.msra.mxu0 0.0
      %579 = vmatprep.subr.mxu0 0.0
      %580 = vmatpush1.msra.mxu0 0.0
      %581 = vmatprep.subr.mxu0 0.0
      %582 = vmatpush1.msra.mxu0 0.0
      %583 = vmatprep.subr.mxu0 0.0
      %584 = vmatpush1.msra.mxu0 0.0
      %585 = vmatprep.subr.mxu0 0.0
      %586 = vmatpush1.msra.mxu0 0.0
      %587 = vmatprep.subr.mxu0 0.0
      %588 = vmatpush1.msra.mxu0 0.0
      %589 = vmatprep.subr.mxu0 0.0
      %590 = vmatpush1.msra.mxu0 0.0
      %591 = vmatprep.mubr.f32.mxu0 0.0
      %592 = vmatmul.mubr.f32.gmra.mrb[0].mxu0 %v526
      %v593 = vpop.f32.mrb[0].mxu0
      %v594 = vadd.f32 %v446, %v593
      %v595 = vpop.f32.mrb[0].mxu0
      %596 = vdwg.mxu0
      %v597 = vadd.f32 %v594, %v146
      %v598 = vtanh.pop %v597
      %v599 = vsel %vm525, %v598, %v375
      %vm600 = vcmp.gt.s32.totalorder %v150, 2
      %s601 = scalar_lea.vmem [#allocation5], 16
      %v602 = vld [vmem:[%s601] sm:$0xff]
      %603 = vmatprep.subr.mxu0 0.0
      %604 = vmatpush1.msra.mxu0 %v125
      %605 = vmatprep.subr.mxu0 0.0
      %606 = vmatpush1.msra.mxu0 %v126
      %607 = vmatprep.subr.mxu0 0.0
      %608 = vmatpush1.msra.mxu0 %v127
      %609 = vmatprep.subr.mxu0 0.0
      %610 = vmatpush1.msra.mxu0 %v128
      %611 = vmatprep.subr.mxu0 0.0
      %612 = vmatpush1.msra.mxu0 %v129
      %613 = vmatprep.subr.mxu0 0.0
      %614 = vmatpush1.msra.mxu0 %v130
      %615 = vmatprep.subr.mxu0 0.0
      %616 = vmatpush1.msra.mxu0 %v131
      %617 = vmatprep.subr.mxu0 0.0
      %618 = vmatpush1.msra.mxu0 %v132
      %619 = vmatprep.subr.mxu0 0.0
      %620 = vmatpush1.msra.mxu0 %v133
      %621 = vmatprep.subr.mxu0 0.0
      %622 = vmatpush1.msra.mxu0 %v134
      %623 = vmatprep.subr.mxu0 0.0
      %624 = vmatpush1.msra.mxu0 %v135
      %625 = vmatprep.subr.mxu0 0.0
      %626 = vmatpush1.msra.mxu0 %v136
      %627 = vmatprep.subr.mxu0 0.0
      %628 = vmatpush1.msra.mxu0 %v137
      %629 = vmatprep.subr.mxu0 0.0
      %630 = vmatpush1.msra.mxu0 %v138
      %631 = vmatprep.subr.mxu0 0.0
      %632 = vmatpush1.msra.mxu0 %v139
      %633 = vmatprep.subr.mxu0 0.0
      %634 = vmatpush1.msra.mxu0 %v140
      %635 = vmatprep.subr.mxu0 0.0
      %636 = vmatpush1.msra.mxu0 0.0
      %637 = vmatprep.subr.mxu0 0.0
      %638 = vmatpush1.msra.mxu0 0.0
      %639 = vmatprep.subr.mxu0 0.0
      %640 = vmatpush1.msra.mxu0 0.0
      %641 = vmatprep.subr.mxu0 0.0
      %642 = vmatpush1.msra.mxu0 0.0
      %643 = vmatprep.subr.mxu0 0.0
      %644 = vmatpush1.msra.mxu0 0.0
      %645 = vmatprep.subr.mxu0 0.0
      %646 = vmatpush1.msra.mxu0 0.0
      %647 = vmatprep.subr.mxu0 0.0
      %648 = vmatpush1.msra.mxu0 0.0
      %649 = vmatprep.subr.mxu0 0.0
      %650 = vmatpush1.msra.mxu0 0.0
      %651 = vmatprep.subr.mxu0 0.0
      %652 = vmatpush1.msra.mxu0 0.0
      %653 = vmatprep.subr.mxu0 0.0
      %654 = vmatpush1.msra.mxu0 0.0
      %655 = vmatprep.subr.mxu0 0.0
      %656 = vmatpush1.msra.mxu0 0.0
      %657 = vmatprep.subr.mxu0 0.0
      %658 = vmatpush1.msra.mxu0 0.0
      %659 = vmatprep.subr.mxu0 0.0
      %660 = vmatpush1.msra.mxu0 0.0
      %661 = vmatprep.subr.mxu0 0.0
      %662 = vmatpush1.msra.mxu0 0.0
      %663 = vmatprep.subr.mxu0 0.0
      %664 = vmatpush1.msra.mxu0 0.0
      %665 = vmatprep.subr.mxu0 0.0
      %666 = vmatpush1.msra.mxu0 0.0
      %667 = vmatprep.mubr.f32.mxu0 0.0
      %668 = vmatmul.mubr.f32.gmra.mrb[0].mxu0 %v599
      %v669 = vpop.f32.mrb[0].mxu0
      %v670 = vadd.f32 0.0, %v669
      %v671 = vpop.f32.mrb[0].mxu0
      %672 = vdwg.mxu0
      %673 = vmatprep.subr.mxu0 0.0
      %674 = vmatpush1.msra.mxu0 %v93
      %675 = vmatprep.subr.mxu0 0.0
      %676 = vmatpush1.msra.mxu0 %v94
      %677 = vmatprep.subr.mxu0 0.0
      %678 = vmatpush1.msra.mxu0 %v95
      %679 = vmatprep.subr.mxu0 0.0
      %680 = vmatpush1.msra.mxu0 %v96
      %681 = vmatprep.subr.mxu0 0.0
      %682 = vmatpush1.msra.mxu0 %v97
      %683 = vmatprep.subr.mxu0 0.0
      %684 = vmatpush1.msra.mxu0 %v98
      %685 = vmatprep.subr.mxu0 0.0
      %686 = vmatpush1.msra.mxu0 %v99
      %687 = vmatprep.subr.mxu0 0.0
      %688 = vmatpush1.msra.mxu0 %v100
      %689 = vmatprep.subr.mxu0 0.0
      %690 = vmatpush1.msra.mxu0 %v101
      %691 = vmatprep.subr.mxu0 0.0
      %692 = vmatpush1.msra.mxu0 %v102
      %693 = vmatprep.subr.mxu0 0.0
      %694 = vmatpush1.msra.mxu0 %v103
      %695 = vmatprep.subr.mxu0 0.0
      %696 = vmatpush1.msra.mxu0 %v104
      %697 = vmatprep.subr.mxu0 0.0
      %698 = vmatpush1.msra.mxu0 %v105
      %699 = vmatprep.subr.mxu0 0.0
      %700 = vmatpush1.msra.mxu0 %v106
      %701 = vmatprep.subr.mxu0 0.0
      %702 = vmatpush1.msra.mxu0 %v107
      %703 = vmatprep.subr.mxu0 0.0
      %704 = vmatpush1.msra.mxu0 %v108
      %705 = vmatprep.subr.mxu0 0.0
      %706 = vmatpush1.msra.mxu0 0.0
      %707 = vmatprep.subr.mxu0 0.0
      %708 = vmatpush1.msra.mxu0 0.0
      %709 = vmatprep.subr.mxu0 0.0
      %710 = vmatpush1.msra.mxu0 0.0
      %711 = vmatprep.subr.mxu0 0.0
      %712 = vmatpush1.msra.mxu0 0.0
      %713 = vmatprep.subr.mxu0 0.0
      %714 = vmatpush1.msra.mxu0 0.0
      %715 = vmatprep.subr.mxu0 0.0
      %716 = vmatpush1.msra.mxu0 0.0
      %717 = vmatprep.subr.mxu0 0.0
      %718 = vmatpush1.msra.mxu0 0.0
      %719 = vmatprep.subr.mxu0 0.0
      %720 = vmatpush1.msra.mxu0 0.0
      %721 = vmatprep.subr.mxu0 0.0
      %722 = vmatpush1.msra.mxu0 0.0
      %723 = vmatprep.subr.mxu0 0.0
      %724 = vmatpush1.msra.mxu0 0.0
      %725 = vmatprep.subr.mxu0 0.0
      %726 = vmatpush1.msra.mxu0 0.0
      %727 = vmatprep.subr.mxu0 0.0
      %728 = vmatpush1.msra.mxu0 0.0
      %729 = vmatprep.subr.mxu0 0.0
      %730 = vmatpush1.msra.mxu0 0.0
      %731 = vmatprep.subr.mxu0 0.0
      %732 = vmatpush1.msra.mxu0 0.0
      %733 = vmatprep.subr.mxu0 0.0
      %734 = vmatpush1.msra.mxu0 0.0
      %735 = vmatprep.subr.mxu0 0.0
      %736 = vmatpush1.msra.mxu0 0.0
      %737 = vmatprep.mubr.f32.mxu0 0.0
      %738 = vmatmul.mubr.f32.gmra.mrb[0].mxu0 %v526
      %v739 = vpop.f32.mrb[0].mxu0
      %v740 = vadd.f32 0.0, %v739
      %v741 = vpop.f32.mrb[0].mxu0
      %742 = vdwg.mxu0
      %v743 = vadd.f32 %v602, %v740
      %v744 = vtanh.pop %v743
      %v745 = vsel %vm600, 1, 0
      %746 = vset.pattern.permute.xlu0 0
      %747 = vperm.xlu0 %746, %v745
      %v748 = vpop.permute.xlu0 %747
      %vm749 = vcmp.eq.s32.totalorder %v748, 1
      %v750 = vsel %vm749, %v744, %v526
      %751 = vmatprep.subr.mxu0 0.0
      %752 = vmatpush1.msra.mxu0 %v109
      %753 = vmatprep.subr.mxu0 0.0
      %754 = vmatpush1.msra.mxu0 %v110
      %755 = vmatprep.subr.mxu0 0.0
      %756 = vmatpush1.msra.mxu0 %v111
      %757 = vmatprep.subr.mxu0 0.0
      %758 = vmatpush1.msra.mxu0 %v112
      %759 = vmatprep.subr.mxu0 0.0
      %760 = vmatpush1.msra.mxu0 %v113
      %761 = vmatprep.subr.mxu0 0.0
      %762 = vmatpush1.msra.mxu0 %v114
      %763 = vmatprep.subr.mxu0 0.0
      %764 = vmatpush1.msra.mxu0 %v115
      %765 = vmatprep.subr.mxu0 0.0
      %766 = vmatpush1.msra.mxu0 %v116
      %767 = vmatprep.subr.mxu0 0.0
      %768 = vmatpush1.msra.mxu0 %v117
      %769 = vmatprep.subr.mxu0 0.0
      %770 = vmatpush1.msra.mxu0 %v118
      %771 = vmatprep.subr.mxu0 0.0
      %772 = vmatpush1.msra.mxu0 %v119
      %773 = vmatprep.subr.mxu0 0.0
      %774 = vmatpush1.msra.mxu0 %v120
      %775 = vmatprep.subr.mxu0 0.0
      %776 = vmatpush1.msra.mxu0 %v121
      %777 = vmatprep.subr.mxu0 0.0
      %778 = vmatpush1.msra.mxu0 %v122
      %779 = vmatprep.subr.mxu0 0.0
      %780 = vmatpush1.msra.mxu0 %v123
      %781 = vmatprep.subr.mxu0 0.0
      %782 = vmatpush1.msra.mxu0 %v124
      %783 = vmatprep.subr.mxu0 0.0
      %784 = vmatpush1.msra.mxu0 0.0
      %785 = vmatprep.subr.mxu0 0.0
      %786 = vmatpush1.msra.mxu0 0.0
      %787 = vmatprep.subr.mxu0 0.0
      %788 = vmatpush1.msra.mxu0 0.0
      %789 = vmatprep.subr.mxu0 0.0
      %790 = vmatpush1.msra.mxu0 0.0
      %791 = vmatprep.subr.mxu0 0.0
      %792 = vmatpush1.msra.mxu0 0.0
      %793 = vmatprep.subr.mxu0 0.0
      %794 = vmatpush1.msra.mxu0 0.0
      %795 = vmatprep.subr.mxu0 0.0
      %796 = vmatpush1.msra.mxu0 0.0
      %797 = vmatprep.subr.mxu0 0.0
      %798 = vmatpush1.msra.mxu0 0.0
      %799 = vmatprep.subr.mxu0 0.0
      %800 = vmatpush1.msra.mxu0 0.0
      %801 = vmatprep.subr.mxu0 0.0
      %802 = vmatpush1.msra.mxu0 0.0
      %803 = vmatprep.subr.mxu0 0.0
      %804 = vmatpush1.msra.mxu0 0.0
      %805 = vmatprep.subr.mxu0 0.0
      %806 = vmatpush1.msra.mxu0 0.0
      %807 = vmatprep.subr.mxu0 0.0
      %808 = vmatpush1.msra.mxu0 0.0
      %809 = vmatprep.subr.mxu0 0.0
      %810 = vmatpush1.msra.mxu0 0.0
      %811 = vmatprep.subr.mxu0 0.0
      %812 = vmatpush1.msra.mxu0 0.0
      %813 = vmatprep.subr.mxu0 0.0
      %814 = vmatpush1.msra.mxu0 0.0
      %815 = vmatprep.mubr.f32.mxu0 0.0
      %816 = vmatmul.mubr.f32.gmra.mrb[0].mxu0 %v750
      %v817 = vpop.f32.mrb[0].mxu0
      %v818 = vadd.f32 %v670, %v817
      %v819 = vpop.f32.mrb[0].mxu0
      %820 = vdwg.mxu0
      %v821 = vadd.f32 %v818, %v146
      %v822 = vtanh.pop %v821
      %v823 = vsel %vm749, %v822, %v599
      %vm824 = vcmp.gt.s32.totalorder %v150, 3
      %s825 = scalar_lea.vmem [#allocation5], 24
      %v826 = vld [vmem:[%s825] sm:$0xff]
      %827 = vmatprep.subr.mxu0 0.0
      %828 = vmatpush1.msra.mxu0 %v125
      %829 = vmatprep.subr.mxu0 0.0
      %830 = vmatpush1.msra.mxu0 %v126
      %831 = vmatprep.subr.mxu0 0.0
      %832 = vmatpush1.msra.mxu0 %v127
      %833 = vmatprep.subr.mxu0 0.0
      %834 = vmatpush1.msra.mxu0 %v128
      %835 = vmatprep.subr.mxu0 0.0
      %836 = vmatpush1.msra.mxu0 %v129
      %837 = vmatprep.subr.mxu0 0.0
      %838 = vmatpush1.msra.mxu0 %v130
      %839 = vmatprep.subr.mxu0 0.0
      %840 = vmatpush1.msra.mxu0 %v131
      %841 = vmatprep.subr.mxu0 0.0
      %842 = vmatpush1.msra.mxu0 %v132
      %843 = vmatprep.subr.mxu0 0.0
      %844 = vmatpush1.msra.mxu0 %v133
      %845 = vmatprep.subr.mxu0 0.0
      %846 = vmatpush1.msra.mxu0 %v134
      %847 = vmatprep.subr.mxu0 0.0
      %848 = vmatpush1.msra.mxu0 %v135
      %849 = vmatprep.subr.mxu0 0.0
      %850 = vmatpush1.msra.mxu0 %v136
      %851 = vmatprep.subr.mxu0 0.0
      %852 = vmatpush1.msra.mxu0 %v137
      %853 = vmatprep.subr.mxu0 0.0
      %854 = vmatpush1.msra.mxu0 %v138
      %855 = vmatprep.subr.mxu0 0.0
      %856 = vmatpush1.msra.mxu0 %v139
      %857 = vmatprep.subr.mxu0 0.0
      %858 = vmatpush1.msra.mxu0 %v140
      %859 = vmatprep.subr.mxu0 0.0
      %860 = vmatpush1.msra.mxu0 0.0
      %861 = vmatprep.subr.mxu0 0.0
      %862 = vmatpush1.msra.mxu0 0.0
      %863 = vmatprep.subr.mxu0 0.0
      %864 = vmatpush1.msra.mxu0 0.0
      %865 = vmatprep.subr.mxu0 0.0
      %866 = vmatpush1.msra.mxu0 0.0
      %867 = vmatprep.subr.mxu0 0.0
      %868 = vmatpush1.msra.mxu0 0.0
      %869 = vmatprep.subr.mxu0 0.0
      %870 = vmatpush1.msra.mxu0 0.0
      %871 = vmatprep.subr.mxu0 0.0
      %872 = vmatpush1.msra.mxu0 0.0
      %873 = vmatprep.subr.mxu0 0.0
      %874 = vmatpush1.msra.mxu0 0.0
      %875 = vmatprep.subr.mxu0 0.0
      %876 = vmatpush1.msra.mxu0 0.0
      %877 = vmatprep.subr.mxu0 0.0
      %878 = vmatpush1.msra.mxu0 0.0
      %879 = vmatprep.subr.mxu0 0.0
      %880 = vmatpush1.msra.mxu0 0.0
      %881 = vmatprep.subr.mxu0 0.0
      %882 = vmatpush1.msra.mxu0 0.0
      %883 = vmatprep.subr.mxu0 0.0
      %884 = vmatpush1.msra.mxu0 0.0
      %885 = vmatprep.subr.mxu0 0.0
      %886 = vmatpush1.msra.mxu0 0.0
      %887 = vmatprep.subr.mxu0 0.0
      %888 = vmatpush1.msra.mxu0 0.0
      %889 = vmatprep.subr.mxu0 0.0
      %890 = vmatpush1.msra.mxu0 0.0
      %891 = vmatprep.mubr.f32.mxu0 0.0
      %892 = vmatmul.mubr.f32.gmra.mrb[0].mxu0 %v823
      %v893 = vpop.f32.mrb[0].mxu0
      %v894 = vadd.f32 0.0, %v893
      %v895 = vpop.f32.mrb[0].mxu0
      %896 = vdwg.mxu0
      %897 = vmatprep.subr.mxu0 0.0
      %898 = vmatpush1.msra.mxu0 %v93
      %899 = vmatprep.subr.mxu0 0.0
      %900 = vmatpush1.msra.mxu0 %v94
      %901 = vmatprep.subr.mxu0 0.0
      %902 = vmatpush1.msra.mxu0 %v95
      %903 = vmatprep.subr.mxu0 0.0
      %904 = vmatpush1.msra.mxu0 %v96
      %905 = vmatprep.subr.mxu0 0.0
      %906 = vmatpush1.msra.mxu0 %v97
      %907 = vmatprep.subr.mxu0 0.0
      %908 = vmatpush1.msra.mxu0 %v98
      %909 = vmatprep.subr.mxu0 0.0
      %910 = vmatpush1.msra.mxu0 %v99
      %911 = vmatprep.subr.mxu0 0.0
      %912 = vmatpush1.msra.mxu0 %v100
      %913 = vmatprep.subr.mxu0 0.0
      %914 = vmatpush1.msra.mxu0 %v101
      %915 = vmatprep.subr.mxu0 0.0
      %916 = vmatpush1.msra.mxu0 %v102
      %917 = vmatprep.subr.mxu0 0.0
      %918 = vmatpush1.msra.mxu0 %v103
      %919 = vmatprep.subr.mxu0 0.0
      %920 = vmatpush1.msra.mxu0 %v104
      %921 = vmatprep.subr.mxu0 0.0
      %922 = vmatpush1.msra.mxu0 %v105
      %923 = vmatprep.subr.mxu0 0.0
      %924 = vmatpush1.msra.mxu0 %v106
      %925 = vmatprep.subr.mxu0 0.0
      %926 = vmatpush1.msra.mxu0 %v107
      %927 = vmatprep.subr.mxu0 0.0
      %928 = vmatpush1.msra.mxu0 %v108
      %929 = vmatprep.subr.mxu0 0.0
      %930 = vmatpush1.msra.mxu0 0.0
      %931 = vmatprep.subr.mxu0 0.0
      %932 = vmatpush1.msra.mxu0 0.0
      %933 = vmatprep.subr.mxu0 0.0
      %934 = vmatpush1.msra.mxu0 0.0
      %935 = vmatprep.subr.mxu0 0.0
      %936 = vmatpush1.msra.mxu0 0.0
      %937 = vmatprep.subr.mxu0 0.0
      %938 = vmatpush1.msra.mxu0 0.0
      %939 = vmatprep.subr.mxu0 0.0
      %940 = vmatpush1.msra.mxu0 0.0
      %941 = vmatprep.subr.mxu0 0.0
      %942 = vmatpush1.msra.mxu0 0.0
      %943 = vmatprep.subr.mxu0 0.0
      %944 = vmatpush1.msra.mxu0 0.0
      %945 = vmatprep.subr.mxu0 0.0
      %946 = vmatpush1.msra.mxu0 0.0
      %947 = vmatprep.subr.mxu0 0.0
      %948 = vmatpush1.msra.mxu0 0.0
      %949 = vmatprep.subr.mxu0 0.0
      %950 = vmatpush1.msra.mxu0 0.0
      %951 = vmatprep.subr.mxu0 0.0
      %952 = vmatpush1.msra.mxu0 0.0
      %953 = vmatprep.subr.mxu0 0.0
      %954 = vmatpush1.msra.mxu0 0.0
      %955 = vmatprep.subr.mxu0 0.0
      %956 = vmatpush1.msra.mxu0 0.0
      %957 = vmatprep.subr.mxu0 0.0
      %958 = vmatpush1.msra.mxu0 0.0
      %959 = vmatprep.subr.mxu0 0.0
      %960 = vmatpush1.msra.mxu0 0.0
      %961 = vmatprep.mubr.f32.mxu0 0.0
      %962 = vmatmul.mubr.f32.gmra.mrb[0].mxu0 %v750
      %v963 = vpop.f32.mrb[0].mxu0
      %v964 = vadd.f32 0.0, %v963
      %v965 = vpop.f32.mrb[0].mxu0
      %966 = vdwg.mxu0
      %v967 = vadd.f32 %v826, %v964
      %v968 = vtanh.pop %v967
      %v969 = vsel %vm824, 1, 0
      %970 = vset.pattern.permute.xlu0 0
      %971 = vperm.xlu0 %970, %v969
      %v972 = vpop.permute.xlu0 %971
      %vm973 = vcmp.eq.s32.totalorder %v972, 1
      %v974 = vsel %vm973, %v968, %v750
      %975 = vmatprep.subr.mxu0 0.0
      %976 = vmatpush1.msra.mxu0 %v109
      %977 = vmatprep.subr.mxu0 0.0
      %978 = vmatpush1.msra.mxu0 %v110
      %979 = vmatprep.subr.mxu0 0.0
      %980 = vmatpush1.msra.mxu0 %v111
      %981 = vmatprep.subr.mxu0 0.0
      %982 = vmatpush1.msra.mxu0 %v112
      %983 = vmatprep.subr.mxu0 0.0
      %984 = vmatpush1.msra.mxu0 %v113
      %985 = vmatprep.subr.mxu0 0.0
      %986 = vmatpush1.msra.mxu0 %v114
      %987 = vmatprep.subr.mxu0 0.0
      %988 = vmatpush1.msra.mxu0 %v115
      %989 = vmatprep.subr.mxu0 0.0
      %990 = vmatpush1.msra.mxu0 %v116
      %991 = vmatprep.subr.mxu0 0.0
      %992 = vmatpush1.msra.mxu0 %v117
      %993 = vmatprep.subr.mxu0 0.0
      %994 = vmatpush1.msra.mxu0 %v118
      %995 = vmatprep.subr.mxu0 0.0
      %996 = vmatpush1.msra.mxu0 %v119
      %997 = vmatprep.subr.mxu0 0.0
      %998 = vmatpush1.msra.mxu0 %v120
      %999 = vmatprep.subr.mxu0 0.0
      %1000 = vmatpush1.msra.mxu0 %v121
      %1001 = vmatprep.subr.mxu0 0.0
      %1002 = vmatpush1.msra.mxu0 %v122
      %1003 = vmatprep.subr.mxu0 0.0
      %1004 = vmatpush1.msra.mxu0 %v123
      %1005 = vmatprep.subr.mxu0 0.0
      %1006 = vmatpush1.msra.mxu0 %v124
      %1007 = vmatprep.subr.mxu0 0.0
      %1008 = vmatpush1.msra.mxu0 0.0
      %1009 = vmatprep.subr.mxu0 0.0
      %1010 = vmatpush1.msra.mxu0 0.0
      %1011 = vmatprep.subr.mxu0 0.0
      %1012 = vmatpush1.msra.mxu0 0.0
      %1013 = vmatprep.subr.mxu0 0.0
      %1014 = vmatpush1.msra.mxu0 0.0
      %1015 = vmatprep.subr.mxu0 0.0
      %1016 = vmatpush1.msra.mxu0 0.0
      %1017 = vmatprep.subr.mxu0 0.0
      %1018 = vmatpush1.msra.mxu0 0.0
      %1019 = vmatprep.subr.mxu0 0.0
      %1020 = vmatpush1.msra.mxu0 0.0
      %1021 = vmatprep.subr.mxu0 0.0
      %1022 = vmatpush1.msra.mxu0 0.0
      %1023 = vmatprep.subr.mxu0 0.0
      %1024 = vmatpush1.msra.mxu0 0.0
      %1025 = vmatprep.subr.mxu0 0.0
      %1026 = vmatpush1.msra.mxu0 0.0
      %1027 = vmatprep.subr.mxu0 0.0
      %1028 = vmatpush1.msra.mxu0 0.0
      %1029 = vmatprep.subr.mxu0 0.0
      %1030 = vmatpush1.msra.mxu0 0.0
      %1031 = vmatprep.subr.mxu0 0.0
      %1032 = vmatpush1.msra.mxu0 0.0
      %1033 = vmatprep.subr.mxu0 0.0
      %1034 = vmatpush1.msra.mxu0 0.0
      %1035 = vmatprep.subr.mxu0 0.0
      %1036 = vmatpush1.msra.mxu0 0.0
      %1037 = vmatprep.subr.mxu0 0.0
      %1038 = vmatpush1.msra.mxu0 0.0
      %1039 = vmatprep.mubr.f32.mxu0 0.0
      %1040 = vmatmul.mubr.f32.gmra.mrb[0].mxu0 %v974
      %v1041 = vpop.f32.mrb[0].mxu0
      %v1042 = vadd.f32 %v894, %v1041
      %v1043 = vpop.f32.mrb[0].mxu0
      %1044 = vdwg.mxu0
      %v1045 = vadd.f32 %v1042, %v146
      %v1046 = vtanh.pop %v1045
      %v1047 = vsel %vm973, %v1046, %v823
      %vm1048 = vcmp.gt.s32.totalorder %v150, 4
      %s1049 = scalar_lea.vmem [#allocation5], 32
      %v1050 = vld [vmem:[%s1049] sm:$0xff]
      %1051 = vmatprep.subr.mxu0 0.0
      %1052 = vmatpush1.msra.mxu0 %v125
      %1053 = vmatprep.subr.mxu0 0.0
      %1054 = vmatpush1.msra.mxu0 %v126
      %1055 = vmatprep.subr.mxu0 0.0
      %1056 = vmatpush1.msra.mxu0 %v127
      %1057 = vmatprep.subr.mxu0 0.0
      %1058 = vmatpush1.msra.mxu0 %v128
      %1059 = vmatprep.subr.mxu0 0.0
      %1060 = vmatpush1.msra.mxu0 %v129
      %1061 = vmatprep.subr.mxu0 0.0
      %1062 = vmatpush1.msra.mxu0 %v130
      %1063 = vmatprep.subr.mxu0 0.0
      %1064 = vmatpush1.msra.mxu0 %v131
      %1065 = vmatprep.subr.mxu0 0.0
      %1066 = vmatpush1.msra.mxu0 %v132
      %1067 = vmatprep.subr.mxu0 0.0
      %1068 = vmatpush1.msra.mxu0 %v133
      %1069 = vmatprep.subr.mxu0 0.0
      %1070 = vmatpush1.msra.mxu0 %v134
      %1071 = vmatprep.subr.mxu0 0.0
      %1072 = vmatpush1.msra.mxu0 %v135
      %1073 = vmatprep.subr.mxu0 0.0
      %1074 = vmatpush1.msra.mxu0 %v136
      %1075 = vmatprep.subr.mxu0 0.0
      %1076 = vmatpush1.msra.mxu0 %v137
      %1077 = vmatprep.subr.mxu0 0.0
      %1078 = vmatpush1.msra.mxu0 %v138
      %1079 = vmatprep.subr.mxu0 0.0
      %1080 = vmatpush1.msra.mxu0 %v139
      %1081 = vmatprep.subr.mxu0 0.0
      %1082 = vmatpush1.msra.mxu0 %v140
      %1083 = vmatprep.subr.mxu0 0.0
      %1084 = vmatpush1.msra.mxu0 0.0
      %1085 = vmatprep.subr.mxu0 0.0
      %1086 = vmatpush1.msra.mxu0 0.0
      %1087 = vmatprep.subr.mxu0 0.0
      %1088 = vmatpush1.msra.mxu0 0.0
      %1089 = vmatprep.subr.mxu0 0.0
      %1090 = vmatpush1.msra.mxu0 0.0
      %1091 = vmatprep.subr.mxu0 0.0
      %1092 = vmatpush1.msra.mxu0 0.0
      %1093 = vmatprep.subr.mxu0 0.0
      %1094 = vmatpush1.msra.mxu0 0.0
      %1095 = vmatprep.subr.mxu0 0.0
      %1096 = vmatpush1.msra.mxu0 0.0
      %1097 = vmatprep.subr.mxu0 0.0
      %1098 = vmatpush1.msra.mxu0 0.0
      %1099 = vmatprep.subr.mxu0 0.0
      %1100 = vmatpush1.msra.mxu0 0.0
      %1101 = vmatprep.subr.mxu0 0.0
      %1102 = vmatpush1.msra.mxu0 0.0
      %1103 = vmatprep.subr.mxu0 0.0
      %1104 = vmatpush1.msra.mxu0 0.0
      %1105 = vmatprep.subr.mxu0 0.0
      %1106 = vmatpush1.msra.mxu0 0.0
      %1107 = vmatprep.subr.mxu0 0.0
      %1108 = vmatpush1.msra.mxu0 0.0
      %1109 = vmatprep.subr.mxu0 0.0
      %1110 = vmatpush1.msra.mxu0 0.0
      %1111 = vmatprep.subr.mxu0 0.0
      %1112 = vmatpush1.msra.mxu0 0.0
      %1113 = vmatprep.subr.mxu0 0.0
      %1114 = vmatpush1.msra.mxu0 0.0
      %1115 = vmatprep.mubr.f32.mxu0 0.0
      %1116 = vmatmul.mubr.f32.gmra.mrb[0].mxu0 %v1047
      %v1117 = vpop.f32.mrb[0].mxu0
      %v1118 = vadd.f32 0.0, %v1117
      %v1119 = vpop.f32.mrb[0].mxu0
      %1120 = vdwg.mxu0
      %1121 = vmatprep.subr.mxu0 0.0
      %1122 = vmatpush1.msra.mxu0 %v93
      %1123 = vmatprep.subr.mxu0 0.0
      %1124 = vmatpush1.msra.mxu0 %v94
      %1125 = vmatprep.subr.mxu0 0.0
      %1126 = vmatpush1.msra.mxu0 %v95
      %1127 = vmatprep.subr.mxu0 0.0
      %1128 = vmatpush1.msra.mxu0 %v96
      %1129 = vmatprep.subr.mxu0 0.0
      %1130 = vmatpush1.msra.mxu0 %v97
      %1131 = vmatprep.subr.mxu0 0.0
      %1132 = vmatpush1.msra.mxu0 %v98
      %1133 = vmatprep.subr.mxu0 0.0
      %1134 = vmatpush1.msra.mxu0 %v99
      %1135 = vmatprep.subr.mxu0 0.0
      %1136 = vmatpush1.msra.mxu0 %v100
      %1137 = vmatprep.subr.mxu0 0.0
      %1138 = vmatpush1.msra.mxu0 %v101
      %1139 = vmatprep.subr.mxu0 0.0
      %1140 = vmatpush1.msra.mxu0 %v102
      %1141 = vmatprep.subr.mxu0 0.0
      %1142 = vmatpush1.msra.mxu0 %v103
      %1143 = vmatprep.subr.mxu0 0.0
      %1144 = vmatpush1.msra.mxu0 %v104
      %1145 = vmatprep.subr.mxu0 0.0
      %1146 = vmatpush1.msra.mxu0 %v105
      %1147 = vmatprep.subr.mxu0 0.0
      %1148 = vmatpush1.msra.mxu0 %v106
      %1149 = vmatprep.subr.mxu0 0.0
      %1150 = vmatpush1.msra.mxu0 %v107
      %1151 = vmatprep.subr.mxu0 0.0
      %1152 = vmatpush1.msra.mxu0 %v108
      %1153 = vmatprep.subr.mxu0 0.0
      %1154 = vmatpush1.msra.mxu0 0.0
      %1155 = vmatprep.subr.mxu0 0.0
      %1156 = vmatpush1.msra.mxu0 0.0
      %1157 = vmatprep.subr.mxu0 0.0
      %1158 = vmatpush1.msra.mxu0 0.0
      %1159 = vmatprep.subr.mxu0 0.0
      %1160 = vmatpush1.msra.mxu0 0.0
      %1161 = vmatprep.subr.mxu0 0.0
      %1162 = vmatpush1.msra.mxu0 0.0
      %1163 = vmatprep.subr.mxu0 0.0
      %1164 = vmatpush1.msra.mxu0 0.0
      %1165 = vmatprep.subr.mxu0 0.0
      %1166 = vmatpush1.msra.mxu0 0.0
      %1167 = vmatprep.subr.mxu0 0.0
      %1168 = vmatpush1.msra.mxu0 0.0
      %1169 = vmatprep.subr.mxu0 0.0
      %1170 = vmatpush1.msra.mxu0 0.0
      %1171 = vmatprep.subr.mxu0 0.0
      %1172 = vmatpush1.msra.mxu0 0.0
      %1173 = vmatprep.subr.mxu0 0.0
      %1174 = vmatpush1.msra.mxu0 0.0
      %1175 = vmatprep.subr.mxu0 0.0
      %1176 = vmatpush1.msra.mxu0 0.0
      %1177 = vmatprep.subr.mxu0 0.0
      %1178 = vmatpush1.msra.mxu0 0.0
      %1179 = vmatprep.subr.mxu0 0.0
      %1180 = vmatpush1.msra.mxu0 0.0
      %1181 = vmatprep.subr.mxu0 0.0
      %1182 = vmatpush1.msra.mxu0 0.0
      %1183 = vmatprep.subr.mxu0 0.0
      %1184 = vmatpush1.msra.mxu0 0.0
      %1185 = vmatprep.mubr.f32.mxu0 0.0
      %1186 = vmatmul.mubr.f32.gmra.mrb[0].mxu0 %v974
      %v1187 = vpop.f32.mrb[0].mxu0
      %v1188 = vadd.f32 0.0, %v1187
      %v1189 = vpop.f32.mrb[0].mxu0
      %1190 = vdwg.mxu0
      %v1191 = vadd.f32 %v1050, %v1188
      %v1192 = vtanh.pop %v1191
      %v1193 = vsel %vm1048, 1, 0
      %1194 = vset.pattern.permute.xlu0 0
      %1195 = vperm.xlu0 %1194, %v1193
      %v1196 = vpop.permute.xlu0 %1195
      %vm1197 = vcmp.eq.s32.totalorder %v1196, 1
      %v1198 = vsel %vm1197, %v1192, %v974
      %1199 = vmatprep.subr.mxu0 0.0
      %1200 = vmatpush1.msra.mxu0 %v109
      %1201 = vmatprep.subr.mxu0 0.0
      %1202 = vmatpush1.msra.mxu0 %v110
      %1203 = vmatprep.subr.mxu0 0.0
      %1204 = vmatpush1.msra.mxu0 %v111
      %1205 = vmatprep.subr.mxu0 0.0
      %1206 = vmatpush1.msra.mxu0 %v112
      %1207 = vmatprep.subr.mxu0 0.0
      %1208 = vmatpush1.msra.mxu0 %v113
      %1209 = vmatprep.subr.mxu0 0.0
      %1210 = vmatpush1.msra.mxu0 %v114
      %1211 = vmatprep.subr.mxu0 0.0
      %1212 = vmatpush1.msra.mxu0 %v115
      %1213 = vmatprep.subr.mxu0 0.0
      %1214 = vmatpush1.msra.mxu0 %v116
      %1215 = vmatprep.subr.mxu0 0.0
      %1216 = vmatpush1.msra.mxu0 %v117
      %1217 = vmatprep.subr.mxu0 0.0
      %1218 = vmatpush1.msra.mxu0 %v118
      %1219 = vmatprep.subr.mxu0 0.0
      %1220 = vmatpush1.msra.mxu0 %v119
      %1221 = vmatprep.subr.mxu0 0.0
      %1222 = vmatpush1.msra.mxu0 %v120
      %1223 = vmatprep.subr.mxu0 0.0
      %1224 = vmatpush1.msra.mxu0 %v121
      %1225 = vmatprep.subr.mxu0 0.0
      %1226 = vmatpush1.msra.mxu0 %v122
      %1227 = vmatprep.subr.mxu0 0.0
      %1228 = vmatpush1.msra.mxu0 %v123
      %1229 = vmatprep.subr.mxu0 0.0
      %1230 = vmatpush1.msra.mxu0 %v124
      %1231 = vmatprep.subr.mxu0 0.0
      %1232 = vmatpush1.msra.mxu0 0.0
      %1233 = vmatprep.subr.mxu0 0.0
      %1234 = vmatpush1.msra.mxu0 0.0
      %1235 = vmatprep.subr.mxu0 0.0
      %1236 = vmatpush1.msra.mxu0 0.0
      %1237 = vmatprep.subr.mxu0 0.0
      %1238 = vmatpush1.msra.mxu0 0.0
      %1239 = vmatprep.subr.mxu0 0.0
      %1240 = vmatpush1.msra.mxu0 0.0
      %1241 = vmatprep.subr.mxu0 0.0
      %1242 = vmatpush1.msra.mxu0 0.0
      %1243 = vmatprep.subr.mxu0 0.0
      %1244 = vmatpush1.msra.mxu0 0.0
      %1245 = vmatprep.subr.mxu0 0.0
      %1246 = vmatpush1.msra.mxu0 0.0
      %1247 = vmatprep.subr.mxu0 0.0
      %1248 = vmatpush1.msra.mxu0 0.0
      %1249 = vmatprep.subr.mxu0 0.0
      %1250 = vmatpush1.msra.mxu0 0.0
      %1251 = vmatprep.subr.mxu0 0.0
      %1252 = vmatpush1.msra.mxu0 0.0
      %1253 = vmatprep.subr.mxu0 0.0
      %1254 = vmatpush1.msra.mxu0 0.0
      %1255 = vmatprep.subr.mxu0 0.0
      %1256 = vmatpush1.msra.mxu0 0.0
      %1257 = vmatprep.subr.mxu0 0.0
      %1258 = vmatpush1.msra.mxu0 0.0
      %1259 = vmatprep.subr.mxu0 0.0
      %1260 = vmatpush1.msra.mxu0 0.0
      %1261 = vmatprep.subr.mxu0 0.0
      %1262 = vmatpush1.msra.mxu0 0.0
      %1263 = vmatprep.mubr.f32.mxu0 0.0
      %1264 = vmatmul.mubr.f32.gmra.mrb[0].mxu0 %v1198
      %v1265 = vpop.f32.mrb[0].mxu0
      %v1266 = vadd.f32 %v1118, %v1265
      %v1267 = vpop.f32.mrb[0].mxu0
      %1268 = vdwg.mxu0
      %v1269 = vadd.f32 %v1266, %v146
      %v1270 = vtanh.pop %v1269
      %v1271 = vsel %vm1197, %v1270, %v1047
      %vm1272 = vcmp.gt.s32.totalorder %v150, 5
      %s1273 = scalar_lea.vmem [#allocation5], 40
      %v1274 = vld [vmem:[%s1273] sm:$0xff]
      %1275 = vmatprep.subr.mxu0 0.0
      %1276 = vmatpush1.msra.mxu0 %v125
      %1277 = vmatprep.subr.mxu0 0.0
      %1278 = vmatpush1.msra.mxu0 %v126
      %1279 = vmatprep.subr.mxu0 0.0
      %1280 = vmatpush1.msra.mxu0 %v127
      %1281 = vmatprep.subr.mxu0 0.0
      %1282 = vmatpush1.msra.mxu0 %v128
      %1283 = vmatprep.subr.mxu0 0.0
      %1284 = vmatpush1.msra.mxu0 %v129
      %1285 = vmatprep.subr.mxu0 0.0
      %1286 = vmatpush1.msra.mxu0 %v130
      %1287 = vmatprep.subr.mxu0 0.0
      %1288 = vmatpush1.msra.mxu0 %v131
      %1289 = vmatprep.subr.mxu0 0.0
      %1290 = vmatpush1.msra.mxu0 %v132
      %1291 = vmatprep.subr.mxu0 0.0
      %1292 = vmatpush1.msra.mxu0 %v133
      %1293 = vmatprep.subr.mxu0 0.0
      %1294 = vmatpush1.msra.mxu0 %v134
      %1295 = vmatprep.subr.mxu0 0.0
      %1296 = vmatpush1.msra.mxu0 %v135
      %1297 = vmatprep.subr.mxu0 0.0
      %1298 = vmatpush1.msra.mxu0 %v136
      %1299 = vmatprep.subr.mxu0 0.0
      %1300 = vmatpush1.msra.mxu0 %v137
      %1301 = vmatprep.subr.mxu0 0.0
      %1302 = vmatpush1.msra.mxu0 %v138
      %1303 = vmatprep.subr.mxu0 0.0
      %1304 = vmatpush1.msra.mxu0 %v139
      %1305 = vmatprep.subr.mxu0 0.0
      %1306 = vmatpush1.msra.mxu0 %v140
      %1307 = vmatprep.subr.mxu0 0.0
      %1308 = vmatpush1.msra.mxu0 0.0
      %1309 = vmatprep.subr.mxu0 0.0
      %1310 = vmatpush1.msra.mxu0 0.0
      %1311 = vmatprep.subr.mxu0 0.0
      %1312 = vmatpush1.msra.mxu0 0.0
      %1313 = vmatprep.subr.mxu0 0.0
      %1314 = vmatpush1.msra.mxu0 0.0
      %1315 = vmatprep.subr.mxu0 0.0
      %1316 = vmatpush1.msra.mxu0 0.0
      %1317 = vmatprep.subr.mxu0 0.0
      %1318 = vmatpush1.msra.mxu0 0.0
      %1319 = vmatprep.subr.mxu0 0.0
      %1320 = vmatpush1.msra.mxu0 0.0
      %1321 = vmatprep.subr.mxu0 0.0
      %1322 = vmatpush1.msra.mxu0 0.0
      %1323 = vmatprep.subr.mxu0 0.0
      %1324 = vmatpush1.msra.mxu0 0.0
      %1325 = vmatprep.subr.mxu0 0.0
      %1326 = vmatpush1.msra.mxu0 0.0
      %1327 = vmatprep.subr.mxu0 0.0
      %1328 = vmatpush1.msra.mxu0 0.0
      %1329 = vmatprep.subr.mxu0 0.0
      %1330 = vmatpush1.msra.mxu0 0.0
      %1331 = vmatprep.subr.mxu0 0.0
      %1332 = vmatpush1.msra.mxu0 0.0
      %1333 = vmatprep.subr.mxu0 0.0
      %1334 = vmatpush1.msra.mxu0 0.0
      %1335 = vmatprep.subr.mxu0 0.0
      %1336 = vmatpush1.msra.mxu0 0.0
      %1337 = vmatprep.subr.mxu0 0.0
      %1338 = vmatpush1.msra.mxu0 0.0
      %1339 = vmatprep.mubr.f32.mxu0 0.0
      %1340 = vmatmul.mubr.f32.gmra.mrb[0].mxu0 %v1271
      %v1341 = vpop.f32.mrb[0].mxu0
      %v1342 = vadd.f32 0.0, %v1341
      %v1343 = vpop.f32.mrb[0].mxu0
      %1344 = vdwg.mxu0
      %1345 = vmatprep.subr.mxu0 0.0
      %1346 = vmatpush1.msra.mxu0 %v93
      %1347 = vmatprep.subr.mxu0 0.0
      %1348 = vmatpush1.msra.mxu0 %v94
      %1349 = vmatprep.subr.mxu0 0.0
      %1350 = vmatpush1.msra.mxu0 %v95
      %1351 = vmatprep.subr.mxu0 0.0
      %1352 = vmatpush1.msra.mxu0 %v96
      %1353 = vmatprep.subr.mxu0 0.0
      %1354 = vmatpush1.msra.mxu0 %v97
      %1355 = vmatprep.subr.mxu0 0.0
      %1356 = vmatpush1.msra.mxu0 %v98
      %1357 = vmatprep.subr.mxu0 0.0
      %1358 = vmatpush1.msra.mxu0 %v99
      %1359 = vmatprep.subr.mxu0 0.0
      %1360 = vmatpush1.msra.mxu0 %v100
      %1361 = vmatprep.subr.mxu0 0.0
      %1362 = vmatpush1.msra.mxu0 %v101
      %1363 = vmatprep.subr.mxu0 0.0
      %1364 = vmatpush1.msra.mxu0 %v102
      %1365 = vmatprep.subr.mxu0 0.0
      %1366 = vmatpush1.msra.mxu0 %v103
      %1367 = vmatprep.subr.mxu0 0.0
      %1368 = vmatpush1.msra.mxu0 %v104
      %1369 = vmatprep.subr.mxu0 0.0
      %1370 = vmatpush1.msra.mxu0 %v105
      %1371 = vmatprep.subr.mxu0 0.0
      %1372 = vmatpush1.msra.mxu0 %v106
      %1373 = vmatprep.subr.mxu0 0.0
      %1374 = vmatpush1.msra.mxu0 %v107
      %1375 = vmatprep.subr.mxu0 0.0
      %1376 = vmatpush1.msra.mxu0 %v108
      %1377 = vmatprep.subr.mxu0 0.0
      %1378 = vmatpush1.msra.mxu0 0.0
      %1379 = vmatprep.subr.mxu0 0.0
      %1380 = vmatpush1.msra.mxu0 0.0
      %1381 = vmatprep.subr.mxu0 0.0
      %1382 = vmatpush1.msra.mxu0 0.0
      %1383 = vmatprep.subr.mxu0 0.0
      %1384 = vmatpush1.msra.mxu0 0.0
      %1385 = vmatprep.subr.mxu0 0.0
      %1386 = vmatpush1.msra.mxu0 0.0
      %1387 = vmatprep.subr.mxu0 0.0
      %1388 = vmatpush1.msra.mxu0 0.0
      %1389 = vmatprep.subr.mxu0 0.0
      %1390 = vmatpush1.msra.mxu0 0.0
      %1391 = vmatprep.subr.mxu0 0.0
      %1392 = vmatpush1.msra.mxu0 0.0
      %1393 = vmatprep.subr.mxu0 0.0
      %1394 = vmatpush1.msra.mxu0 0.0
      %1395 = vmatprep.subr.mxu0 0.0
      %1396 = vmatpush1.msra.mxu0 0.0
      %1397 = vmatprep.subr.mxu0 0.0
      %1398 = vmatpush1.msra.mxu0 0.0
      %1399 = vmatprep.subr.mxu0 0.0
      %1400 = vmatpush1.msra.mxu0 0.0
      %1401 = vmatprep.subr.mxu0 0.0
      %1402 = vmatpush1.msra.mxu0 0.0
      %1403 = vmatprep.subr.mxu0 0.0
      %1404 = vmatpush1.msra.mxu0 0.0
      %1405 = vmatprep.subr.mxu0 0.0
      %1406 = vmatpush1.msra.mxu0 0.0
      %1407 = vmatprep.subr.mxu0 0.0
      %1408 = vmatpush1.msra.mxu0 0.0
      %1409 = vmatprep.mubr.f32.mxu0 0.0
      %1410 = vmatmul.mubr.f32.gmra.mrb[0].mxu0 %v1198
      %v1411 = vpop.f32.mrb[0].mxu0
      %v1412 = vadd.f32 0.0, %v1411
      %v1413 = vpop.f32.mrb[0].mxu0
      %1414 = vdwg.mxu0
      %v1415 = vadd.f32 %v1274, %v1412
      %v1416 = vtanh.pop %v1415
      %v1417 = vsel %vm1272, 1, 0
      %1418 = vset.pattern.permute.xlu0 0
      %1419 = vperm.xlu0 %1418, %v1417
      %v1420 = vpop.permute.xlu0 %1419
      %vm1421 = vcmp.eq.s32.totalorder %v1420, 1
      %v1422 = vsel %vm1421, %v1416, %v1198
      %1423 = vmatprep.subr.mxu0 0.0
      %1424 = vmatpush1.msra.mxu0 %v109
      %1425 = vmatprep.subr.mxu0 0.0
      %1426 = vmatpush1.msra.mxu0 %v110
      %1427 = vmatprep.subr.mxu0 0.0
      %1428 = vmatpush1.msra.mxu0 %v111
      %1429 = vmatprep.subr.mxu0 0.0
      %1430 = vmatpush1.msra.mxu0 %v112
      %1431 = vmatprep.subr.mxu0 0.0
      %1432 = vmatpush1.msra.mxu0 %v113
      %1433 = vmatprep.subr.mxu0 0.0
      %1434 = vmatpush1.msra.mxu0 %v114
      %1435 = vmatprep.subr.mxu0 0.0
      %1436 = vmatpush1.msra.mxu0 %v115
      %1437 = vmatprep.subr.mxu0 0.0
      %1438 = vmatpush1.msra.mxu0 %v116
      %1439 = vmatprep.subr.mxu0 0.0
      %1440 = vmatpush1.msra.mxu0 %v117
      %1441 = vmatprep.subr.mxu0 0.0
      %1442 = vmatpush1.msra.mxu0 %v118
      %1443 = vmatprep.subr.mxu0 0.0
      %1444 = vmatpush1.msra.mxu0 %v119
      %1445 = vmatprep.subr.mxu0 0.0
      %1446 = vmatpush1.msra.mxu0 %v120
      %1447 = vmatprep.subr.mxu0 0.0
      %1448 = vmatpush1.msra.mxu0 %v121
      %1449 = vmatprep.subr.mxu0 0.0
      %1450 = vmatpush1.msra.mxu0 %v122
      %1451 = vmatprep.subr.mxu0 0.0
      %1452 = vmatpush1.msra.mxu0 %v123
      %1453 = vmatprep.subr.mxu0 0.0
      %1454 = vmatpush1.msra.mxu0 %v124
      %1455 = vmatprep.subr.mxu0 0.0
      %1456 = vmatpush1.msra.mxu0 0.0
      %1457 = vmatprep.subr.mxu0 0.0
      %1458 = vmatpush1.msra.mxu0 0.0
      %1459 = vmatprep.subr.mxu0 0.0
      %1460 = vmatpush1.msra.mxu0 0.0
      %1461 = vmatprep.subr.mxu0 0.0
      %1462 = vmatpush1.msra.mxu0 0.0
      %1463 = vmatprep.subr.mxu0 0.0
      %1464 = vmatpush1.msra.mxu0 0.0
      %1465 = vmatprep.subr.mxu0 0.0
      %1466 = vmatpush1.msra.mxu0 0.0
      %1467 = vmatprep.subr.mxu0 0.0
      %1468 = vmatpush1.msra.mxu0 0.0
      %1469 = vmatprep.subr.mxu0 0.0
      %1470 = vmatpush1.msra.mxu0 0.0
      %1471 = vmatprep.subr.mxu0 0.0
      %1472 = vmatpush1.msra.mxu0 0.0
      %1473 = vmatprep.subr.mxu0 0.0
      %1474 = vmatpush1.msra.mxu0 0.0
      %1475 = vmatprep.subr.mxu0 0.0
      %1476 = vmatpush1.msra.mxu0 0.0
      %1477 = vmatprep.subr.mxu0 0.0
      %1478 = vmatpush1.msra.mxu0 0.0
      %1479 = vmatprep.subr.mxu0 0.0
      %1480 = vmatpush1.msra.mxu0 0.0
      %1481 = vmatprep.subr.mxu0 0.0
      %1482 = vmatpush1.msra.mxu0 0.0
      %1483 = vmatprep.subr.mxu0 0.0
      %1484 = vmatpush1.msra.mxu0 0.0
      %1485 = vmatprep.subr.mxu0 0.0
      %1486 = vmatpush1.msra.mxu0 0.0
      %1487 = vmatprep.mubr.f32.mxu0 0.0
      %1488 = vmatmul.mubr.f32.gmra.mrb[0].mxu0 %v1422
      %v1489 = vpop.f32.mrb[0].mxu0
      %v1490 = vadd.f32 %v1342, %v1489
      %v1491 = vpop.f32.mrb[0].mxu0
      %1492 = vdwg.mxu0
      %v1493 = vadd.f32 %v1490, %v146
      %v1494 = vtanh.pop %v1493
      %v1495 = vsel %vm1421, %v1494, %v1271
      %vm1496 = vcmp.gt.s32.totalorder %v150, 6
      %s1497 = scalar_lea.vmem [#allocation5], 48
      %v1498 = vld [vmem:[%s1497] sm:$0xff]
      %1499 = vmatprep.subr.mxu0 0.0
      %1500 = vmatpush1.msra.mxu0 %v125
      %1501 = vmatprep.subr.mxu0 0.0
      %1502 = vmatpush1.msra.mxu0 %v126
      %1503 = vmatprep.subr.mxu0 0.0
      %1504 = vmatpush1.msra.mxu0 %v127
      %1505 = vmatprep.subr.mxu0 0.0
      %1506 = vmatpush1.msra.mxu0 %v128
      %1507 = vmatprep.subr.mxu0 0.0
      %1508 = vmatpush1.msra.mxu0 %v129
      %1509 = vmatprep.subr.mxu0 0.0
      %1510 = vmatpush1.msra.mxu0 %v130
      %1511 = vmatprep.subr.mxu0 0.0
      %1512 = vmatpush1.msra.mxu0 %v131
      %1513 = vmatprep.subr.mxu0 0.0
      %1514 = vmatpush1.msra.mxu0 %v132
      %1515 = vmatprep.subr.mxu0 0.0
      %1516 = vmatpush1.msra.mxu0 %v133
      %1517 = vmatprep.subr.mxu0 0.0
      %1518 = vmatpush1.msra.mxu0 %v134
      %1519 = vmatprep.subr.mxu0 0.0
      %1520 = vmatpush1.msra.mxu0 %v135
      %1521 = vmatprep.subr.mxu0 0.0
      %1522 = vmatpush1.msra.mxu0 %v136
      %1523 = vmatprep.subr.mxu0 0.0
      %1524 = vmatpush1.msra.mxu0 %v137
      %1525 = vmatprep.subr.mxu0 0.0
      %1526 = vmatpush1.msra.mxu0 %v138
      %1527 = vmatprep.subr.mxu0 0.0
      %1528 = vmatpush1.msra.mxu0 %v139
      %1529 = vmatprep.subr.mxu0 0.0
      %1530 = vmatpush1.msra.mxu0 %v140
      %1531 = vmatprep.subr.mxu0 0.0
      %1532 = vmatpush1.msra.mxu0 0.0
      %1533 = vmatprep.subr.mxu0 0.0
      %1534 = vmatpush1.msra.mxu0 0.0
      %1535 = vmatprep.subr.mxu0 0.0
      %1536 = vmatpush1.msra.mxu0 0.0
      %1537 = vmatprep.subr.mxu0 0.0
      %1538 = vmatpush1.msra.mxu0 0.0
      %1539 = vmatprep.subr.mxu0 0.0
      %1540 = vmatpush1.msra.mxu0 0.0
      %1541 = vmatprep.subr.mxu0 0.0
      %1542 = vmatpush1.msra.mxu0 0.0
      %1543 = vmatprep.subr.mxu0 0.0
      %1544 = vmatpush1.msra.mxu0 0.0
      %1545 = vmatprep.subr.mxu0 0.0
      %1546 = vmatpush1.msra.mxu0 0.0
      %1547 = vmatprep.subr.mxu0 0.0
      %1548 = vmatpush1.msra.mxu0 0.0
      %1549 = vmatprep.subr.mxu0 0.0
      %1550 = vmatpush1.msra.mxu0 0.0
      %1551 = vmatprep.subr.mxu0 0.0
      %1552 = vmatpush1.msra.mxu0 0.0
      %1553 = vmatprep.subr.mxu0 0.0
      %1554 = vmatpush1.msra.mxu0 0.0
      %1555 = vmatprep.subr.mxu0 0.0
      %1556 = vmatpush1.msra.mxu0 0.0
      %1557 = vmatprep.subr.mxu0 0.0
      %1558 = vmatpush1.msra.mxu0 0.0
      %1559 = vmatprep.subr.mxu0 0.0
      %1560 = vmatpush1.msra.mxu0 0.0
      %1561 = vmatprep.subr.mxu0 0.0
      %1562 = vmatpush1.msra.mxu0 0.0
      %1563 = vmatprep.mubr.f32.mxu0 0.0
      %1564 = vmatmul.mubr.f32.gmra.mrb[0].mxu0 %v1495
      %v1565 = vpop.f32.mrb[0].mxu0
      %v1566 = vadd.f32 0.0, %v1565
      %v1567 = vpop.f32.mrb[0].mxu0
      %1568 = vdwg.mxu0
      %1569 = vmatprep.subr.mxu0 0.0
      %1570 = vmatpush1.msra.mxu0 %v93
      %1571 = vmatprep.subr.mxu0 0.0
      %1572 = vmatpush1.msra.mxu0 %v94
      %1573 = vmatprep.subr.mxu0 0.0
      %1574 = vmatpush1.msra.mxu0 %v95
      %1575 = vmatprep.subr.mxu0 0.0
      %1576 = vmatpush1.msra.mxu0 %v96
      %1577 = vmatprep.subr.mxu0 0.0
      %1578 = vmatpush1.msra.mxu0 %v97
      %1579 = vmatprep.subr.mxu0 0.0
      %1580 = vmatpush1.msra.mxu0 %v98
      %1581 = vmatprep.subr.mxu0 0.0
      %1582 = vmatpush1.msra.mxu0 %v99
      %1583 = vmatprep.subr.mxu0 0.0
      %1584 = vmatpush1.msra.mxu0 %v100
      %1585 = vmatprep.subr.mxu0 0.0
      %1586 = vmatpush1.msra.mxu0 %v101
      %1587 = vmatprep.subr.mxu0 0.0
      %1588 = vmatpush1.msra.mxu0 %v102
      %1589 = vmatprep.subr.mxu0 0.0
      %1590 = vmatpush1.msra.mxu0 %v103
      %1591 = vmatprep.subr.mxu0 0.0
      %1592 = vmatpush1.msra.mxu0 %v104
      %1593 = vmatprep.subr.mxu0 0.0
      %1594 = vmatpush1.msra.mxu0 %v105
      %1595 = vmatprep.subr.mxu0 0.0
      %1596 = vmatpush1.msra.mxu0 %v106
      %1597 = vmatprep.subr.mxu0 0.0
      %1598 = vmatpush1.msra.mxu0 %v107
      %1599 = vmatprep.subr.mxu0 0.0
      %1600 = vmatpush1.msra.mxu0 %v108
      %1601 = vmatprep.subr.mxu0 0.0
      %1602 = vmatpush1.msra.mxu0 0.0
      %1603 = vmatprep.subr.mxu0 0.0
      %1604 = vmatpush1.msra.mxu0 0.0
      %1605 = vmatprep.subr.mxu0 0.0
      %1606 = vmatpush1.msra.mxu0 0.0
      %1607 = vmatprep.subr.mxu0 0.0
      %1608 = vmatpush1.msra.mxu0 0.0
      %1609 = vmatprep.subr.mxu0 0.0
      %1610 = vmatpush1.msra.mxu0 0.0
      %1611 = vmatprep.subr.mxu0 0.0
      %1612 = vmatpush1.msra.mxu0 0.0
      %1613 = vmatprep.subr.mxu0 0.0
      %1614 = vmatpush1.msra.mxu0 0.0
      %1615 = vmatprep.subr.mxu0 0.0
      %1616 = vmatpush1.msra.mxu0 0.0
      %1617 = vmatprep.subr.mxu0 0.0
      %1618 = vmatpush1.msra.mxu0 0.0
      %1619 = vmatprep.subr.mxu0 0.0
      %1620 = vmatpush1.msra.mxu0 0.0
      %1621 = vmatprep.subr.mxu0 0.0
      %1622 = vmatpush1.msra.mxu0 0.0
      %1623 = vmatprep.subr.mxu0 0.0
      %1624 = vmatpush1.msra.mxu0 0.0
      %1625 = vmatprep.subr.mxu0 0.0
      %1626 = vmatpush1.msra.mxu0 0.0
      %1627 = vmatprep.subr.mxu0 0.0
      %1628 = vmatpush1.msra.mxu0 0.0
      %1629 = vmatprep.subr.mxu0 0.0
      %1630 = vmatpush1.msra.mxu0 0.0
      %1631 = vmatprep.subr.mxu0 0.0
      %1632 = vmatpush1.msra.mxu0 0.0
      %1633 = vmatprep.mubr.f32.mxu0 0.0
      %1634 = vmatmul.mubr.f32.gmra.mrb[0].mxu0 %v1422
      %v1635 = vpop.f32.mrb[0].mxu0
      %v1636 = vadd.f32 0.0, %v1635
      %v1637 = vpop.f32.mrb[0].mxu0
      %1638 = vdwg.mxu0
      %v1639 = vadd.f32 %v1498, %v1636
      %v1640 = vtanh.pop %v1639
      %v1641 = vsel %vm1496, 1, 0
      %1642 = vset.pattern.permute.xlu0 0
      %1643 = vperm.xlu0 %1642, %v1641
      %v1644 = vpop.permute.xlu0 %1643
      %vm1645 = vcmp.eq.s32.totalorder %v1644, 1
      %v1646 = vsel %vm1645, %v1640, %v1422
      %1647 = vmatprep.subr.mxu0 0.0
      %1648 = vmatpush1.msra.mxu0 %v109
      %1649 = vmatprep.subr.mxu0 0.0
      %1650 = vmatpush1.msra.mxu0 %v110
      %1651 = vmatprep.subr.mxu0 0.0
      %1652 = vmatpush1.msra.mxu0 %v111
      %1653 = vmatprep.subr.mxu0 0.0
      %1654 = vmatpush1.msra.mxu0 %v112
      %1655 = vmatprep.subr.mxu0 0.0
      %1656 = vmatpush1.msra.mxu0 %v113
      %1657 = vmatprep.subr.mxu0 0.0
      %1658 = vmatpush1.msra.mxu0 %v114
      %1659 = vmatprep.subr.mxu0 0.0
      %1660 = vmatpush1.msra.mxu0 %v115
      %1661 = vmatprep.subr.mxu0 0.0
      %1662 = vmatpush1.msra.mxu0 %v116
      %1663 = vmatprep.subr.mxu0 0.0
      %1664 = vmatpush1.msra.mxu0 %v117
      %1665 = vmatprep.subr.mxu0 0.0
      %1666 = vmatpush1.msra.mxu0 %v118
      %1667 = vmatprep.subr.mxu0 0.0
      %1668 = vmatpush1.msra.mxu0 %v119
      %1669 = vmatprep.subr.mxu0 0.0
      %1670 = vmatpush1.msra.mxu0 %v120
      %1671 = vmatprep.subr.mxu0 0.0
      %1672 = vmatpush1.msra.mxu0 %v121
      %1673 = vmatprep.subr.mxu0 0.0
      %1674 = vmatpush1.msra.mxu0 %v122
      %1675 = vmatprep.subr.mxu0 0.0
      %1676 = vmatpush1.msra.mxu0 %v123
      %1677 = vmatprep.subr.mxu0 0.0
      %1678 = vmatpush1.msra.mxu0 %v124
      %1679 = vmatprep.subr.mxu0 0.0
      %1680 = vmatpush1.msra.mxu0 0.0
      %1681 = vmatprep.subr.mxu0 0.0
      %1682 = vmatpush1.msra.mxu0 0.0
      %1683 = vmatprep.subr.mxu0 0.0
      %1684 = vmatpush1.msra.mxu0 0.0
      %1685 = vmatprep.subr.mxu0 0.0
      %1686 = vmatpush1.msra.mxu0 0.0
      %1687 = vmatprep.subr.mxu0 0.0
      %1688 = vmatpush1.msra.mxu0 0.0
      %1689 = vmatprep.subr.mxu0 0.0
      %1690 = vmatpush1.msra.mxu0 0.0
      %1691 = vmatprep.subr.mxu0 0.0
      %1692 = vmatpush1.msra.mxu0 0.0
      %1693 = vmatprep.subr.mxu0 0.0
      %1694 = vmatpush1.msra.mxu0 0.0
      %1695 = vmatprep.subr.mxu0 0.0
      %1696 = vmatpush1.msra.mxu0 0.0
      %1697 = vmatprep.subr.mxu0 0.0
      %1698 = vmatpush1.msra.mxu0 0.0
      %1699 = vmatprep.subr.mxu0 0.0
      %1700 = vmatpush1.msra.mxu0 0.0
      %1701 = vmatprep.subr.mxu0 0.0
      %1702 = vmatpush1.msra.mxu0 0.0
      %1703 = vmatprep.subr.mxu0 0.0
      %1704 = vmatpush1.msra.mxu0 0.0
      %1705 = vmatprep.subr.mxu0 0.0
      %1706 = vmatpush1.msra.mxu0 0.0
      %1707 = vmatprep.subr.mxu0 0.0
      %1708 = vmatpush1.msra.mxu0 0.0
      %1709 = vmatprep.subr.mxu0 0.0
      %1710 = vmatpush1.msra.mxu0 0.0
      %1711 = vmatprep.mubr.f32.mxu0 0.0
      %1712 = vmatmul.mubr.f32.gmra.mrb[0].mxu0 %v1646
      %v1713 = vpop.f32.mrb[0].mxu0
      %v1714 = vadd.f32 %v1566, %v1713
      %v1715 = vpop.f32.mrb[0].mxu0
      %1716 = vdwg.mxu0
      %v1717 = vadd.f32 %v1714, %v146
      %v1718 = vtanh.pop %v1717
      %v1719 = vsel %vm1645, %v1718, %v1495
      %vm1720 = vcmp.gt.s32.totalorder %v150, 7
      %s1721 = scalar_lea.vmem [#allocation5], 56
      %v1722 = vld [vmem:[%s1721] sm:$0xff]
      %1723 = vmatprep.subr.mxu0 0.0
      %1724 = vmatpush1.msra.mxu0 %v125
      %1725 = vmatprep.subr.mxu0 0.0
      %1726 = vmatpush1.msra.mxu0 %v126
      %1727 = vmatprep.subr.mxu0 0.0
      %1728 = vmatpush1.msra.mxu0 %v127
      %1729 = vmatprep.subr.mxu0 0.0
      %1730 = vmatpush1.msra.mxu0 %v128
      %1731 = vmatprep.subr.mxu0 0.0
      %1732 = vmatpush1.msra.mxu0 %v129
      %1733 = vmatprep.subr.mxu0 0.0
      %1734 = vmatpush1.msra.mxu0 %v130
      %1735 = vmatprep.subr.mxu0 0.0
      %1736 = vmatpush1.msra.mxu0 %v131
      %1737 = vmatprep.subr.mxu0 0.0
      %1738 = vmatpush1.msra.mxu0 %v132
      %1739 = vmatprep.subr.mxu0 0.0
      %1740 = vmatpush1.msra.mxu0 %v133
      %1741 = vmatprep.subr.mxu0 0.0
      %1742 = vmatpush1.msra.mxu0 %v134
      %1743 = vmatprep.subr.mxu0 0.0
      %1744 = vmatpush1.msra.mxu0 %v135
      %1745 = vmatprep.subr.mxu0 0.0
      %1746 = vmatpush1.msra.mxu0 %v136
      %1747 = vmatprep.subr.mxu0 0.0
      %1748 = vmatpush1.msra.mxu0 %v137
      %1749 = vmatprep.subr.mxu0 0.0
      %1750 = vmatpush1.msra.mxu0 %v138
      %1751 = vmatprep.subr.mxu0 0.0
      %1752 = vmatpush1.msra.mxu0 %v139
      %1753 = vmatprep.subr.mxu0 0.0
      %1754 = vmatpush1.msra.mxu0 %v140
      %1755 = vmatprep.subr.mxu0 0.0
      %1756 = vmatpush1.msra.mxu0 0.0
      %1757 = vmatprep.subr.mxu0 0.0
      %1758 = vmatpush1.msra.mxu0 0.0
      %1759 = vmatprep.subr.mxu0 0.0
      %1760 = vmatpush1.msra.mxu0 0.0
      %1761 = vmatprep.subr.mxu0 0.0
      %1762 = vmatpush1.msra.mxu0 0.0
      %1763 = vmatprep.subr.mxu0 0.0
      %1764 = vmatpush1.msra.mxu0 0.0
      %1765 = vmatprep.subr.mxu0 0.0
      %1766 = vmatpush1.msra.mxu0 0.0
      %1767 = vmatprep.subr.mxu0 0.0
      %1768 = vmatpush1.msra.mxu0 0.0
      %1769 = vmatprep.subr.mxu0 0.0
      %1770 = vmatpush1.msra.mxu0 0.0
      %1771 = vmatprep.subr.mxu0 0.0
      %1772 = vmatpush1.msra.mxu0 0.0
      %1773 = vmatprep.subr.mxu0 0.0
      %1774 = vmatpush1.msra.mxu0 0.0
      %1775 = vmatprep.subr.mxu0 0.0
      %1776 = vmatpush1.msra.mxu0 0.0
      %1777 = vmatprep.subr.mxu0 0.0
      %1778 = vmatpush1.msra.mxu0 0.0
      %1779 = vmatprep.subr.mxu0 0.0
      %1780 = vmatpush1.msra.mxu0 0.0
      %1781 = vmatprep.subr.mxu0 0.0
      %1782 = vmatpush1.msra.mxu0 0.0
      %1783 = vmatprep.subr.mxu0 0.0
      %1784 = vmatpush1.msra.mxu0 0.0
      %1785 = vmatprep.subr.mxu0 0.0
      %1786 = vmatpush1.msra.mxu0 0.0
      %1787 = vmatprep.mubr.f32.mxu0 0.0
      %1788 = vmatmul.mubr.f32.gmra.mrb[0].mxu0 %v1719
      %v1789 = vpop.f32.mrb[0].mxu0
      %v1790 = vadd.f32 0.0, %v1789
      %v1791 = vpop.f32.mrb[0].mxu0
      %1792 = vdwg.mxu0
      %1793 = vmatprep.subr.mxu0 0.0
      %1794 = vmatpush1.msra.mxu0 %v93
      %1795 = vmatprep.subr.mxu0 0.0
      %1796 = vmatpush1.msra.mxu0 %v94
      %1797 = vmatprep.subr.mxu0 0.0
      %1798 = vmatpush1.msra.mxu0 %v95
      %1799 = vmatprep.subr.mxu0 0.0
      %1800 = vmatpush1.msra.mxu0 %v96
      %1801 = vmatprep.subr.mxu0 0.0
      %1802 = vmatpush1.msra.mxu0 %v97
      %1803 = vmatprep.subr.mxu0 0.0
      %1804 = vmatpush1.msra.mxu0 %v98
      %1805 = vmatprep.subr.mxu0 0.0
      %1806 = vmatpush1.msra.mxu0 %v99
      %1807 = vmatprep.subr.mxu0 0.0
      %1808 = vmatpush1.msra.mxu0 %v100
      %1809 = vmatprep.subr.mxu0 0.0
      %1810 = vmatpush1.msra.mxu0 %v101
      %1811 = vmatprep.subr.mxu0 0.0
      %1812 = vmatpush1.msra.mxu0 %v102
      %1813 = vmatprep.subr.mxu0 0.0
      %1814 = vmatpush1.msra.mxu0 %v103
      %1815 = vmatprep.subr.mxu0 0.0
      %1816 = vmatpush1.msra.mxu0 %v104
      %1817 = vmatprep.subr.mxu0 0.0
      %1818 = vmatpush1.msra.mxu0 %v105
      %1819 = vmatprep.subr.mxu0 0.0
      %1820 = vmatpush1.msra.mxu0 %v106
      %1821 = vmatprep.subr.mxu0 0.0
      %1822 = vmatpush1.msra.mxu0 %v107
      %1823 = vmatprep.subr.mxu0 0.0
      %1824 = vmatpush1.msra.mxu0 %v108
      %1825 = vmatprep.subr.mxu0 0.0
      %1826 = vmatpush1.msra.mxu0 0.0
      %1827 = vmatprep.subr.mxu0 0.0
      %1828 = vmatpush1.msra.mxu0 0.0
      %1829 = vmatprep.subr.mxu0 0.0
      %1830 = vmatpush1.msra.mxu0 0.0
      %1831 = vmatprep.subr.mxu0 0.0
      %1832 = vmatpush1.msra.mxu0 0.0
      %1833 = vmatprep.subr.mxu0 0.0
      %1834 = vmatpush1.msra.mxu0 0.0
      %1835 = vmatprep.subr.mxu0 0.0
      %1836 = vmatpush1.msra.mxu0 0.0
      %1837 = vmatprep.subr.mxu0 0.0
      %1838 = vmatpush1.msra.mxu0 0.0
      %1839 = vmatprep.subr.mxu0 0.0
      %1840 = vmatpush1.msra.mxu0 0.0
      %1841 = vmatprep.subr.mxu0 0.0
      %1842 = vmatpush1.msra.mxu0 0.0
      %1843 = vmatprep.subr.mxu0 0.0
      %1844 = vmatpush1.msra.mxu0 0.0
      %1845 = vmatprep.subr.mxu0 0.0
      %1846 = vmatpush1.msra.mxu0 0.0
      %1847 = vmatprep.subr.mxu0 0.0
      %1848 = vmatpush1.msra.mxu0 0.0
      %1849 = vmatprep.subr.mxu0 0.0
      %1850 = vmatpush1.msra.mxu0 0.0
      %1851 = vmatprep.subr.mxu0 0.0
      %1852 = vmatpush1.msra.mxu0 0.0
      %1853 = vmatprep.subr.mxu0 0.0
      %1854 = vmatpush1.msra.mxu0 0.0
      %1855 = vmatprep.subr.mxu0 0.0
      %1856 = vmatpush1.msra.mxu0 0.0
      %1857 = vmatprep.mubr.f32.mxu0 0.0
      %1858 = vmatmul.mubr.f32.gmra.mrb[0].mxu0 %v1646
      %v1859 = vpop.f32.mrb[0].mxu0
      %v1860 = vadd.f32 0.0, %v1859
      %v1861 = vpop.f32.mrb[0].mxu0
      %1862 = vdwg.mxu0
      %v1863 = vadd.f32 %v1722, %v1860
      %v1864 = vtanh.pop %v1863
      %v1865 = vsel %vm1720, 1, 0
      %1866 = vset.pattern.permute.xlu0 0
      %1867 = vperm.xlu0 %1866, %v1865
      %v1868 = vpop.permute.xlu0 %1867
      %vm1869 = vcmp.eq.s32.totalorder %v1868, 1
      %v1870 = vsel %vm1869, %v1864, %v1646
      %1871 = vmatprep.subr.mxu0 0.0
      %1872 = vmatpush1.msra.mxu0 %v109
      %1873 = vmatprep.subr.mxu0 0.0
      %1874 = vmatpush1.msra.mxu0 %v110
      %1875 = vmatprep.subr.mxu0 0.0
      %1876 = vmatpush1.msra.mxu0 %v111
      %1877 = vmatprep.subr.mxu0 0.0
      %1878 = vmatpush1.msra.mxu0 %v112
      %1879 = vmatprep.subr.mxu0 0.0
      %1880 = vmatpush1.msra.mxu0 %v113
      %1881 = vmatprep.subr.mxu0 0.0
      %1882 = vmatpush1.msra.mxu0 %v114
      %1883 = vmatprep.subr.mxu0 0.0
      %1884 = vmatpush1.msra.mxu0 %v115
      %1885 = vmatprep.subr.mxu0 0.0
      %1886 = vmatpush1.msra.mxu0 %v116
      %1887 = vmatprep.subr.mxu0 0.0
      %1888 = vmatpush1.msra.mxu0 %v117
      %1889 = vmatprep.subr.mxu0 0.0
      %1890 = vmatpush1.msra.mxu0 %v118
      %1891 = vmatprep.subr.mxu0 0.0
      %1892 = vmatpush1.msra.mxu0 %v119
      %1893 = vmatprep.subr.mxu0 0.0
      %1894 = vmatpush1.msra.mxu0 %v120
      %1895 = vmatprep.subr.mxu0 0.0
      %1896 = vmatpush1.msra.mxu0 %v121
      %1897 = vmatprep.subr.mxu0 0.0
      %1898 = vmatpush1.msra.mxu0 %v122
      %1899 = vmatprep.subr.mxu0 0.0
      %1900 = vmatpush1.msra.mxu0 %v123
      %1901 = vmatprep.subr.mxu0 0.0
      %1902 = vmatpush1.msra.mxu0 %v124
      %1903 = vmatprep.subr.mxu0 0.0
      %1904 = vmatpush1.msra.mxu0 0.0
      %1905 = vmatprep.subr.mxu0 0.0
      %1906 = vmatpush1.msra.mxu0 0.0
      %1907 = vmatprep.subr.mxu0 0.0
      %1908 = vmatpush1.msra.mxu0 0.0
      %1909 = vmatprep.subr.mxu0 0.0
      %1910 = vmatpush1.msra.mxu0 0.0
      %1911 = vmatprep.subr.mxu0 0.0
      %1912 = vmatpush1.msra.mxu0 0.0
      %1913 = vmatprep.subr.mxu0 0.0
      %1914 = vmatpush1.msra.mxu0 0.0
      %1915 = vmatprep.subr.mxu0 0.0
      %1916 = vmatpush1.msra.mxu0 0.0
      %1917 = vmatprep.subr.mxu0 0.0
      %1918 = vmatpush1.msra.mxu0 0.0
      %1919 = vmatprep.subr.mxu0 0.0
      %1920 = vmatpush1.msra.mxu0 0.0
      %1921 = vmatprep.subr.mxu0 0.0
      %1922 = vmatpush1.msra.mxu0 0.0
      %1923 = vmatprep.subr.mxu0 0.0
      %1924 = vmatpush1.msra.mxu0 0.0
      %1925 = vmatprep.subr.mxu0 0.0
      %1926 = vmatpush1.msra.mxu0 0.0
      %1927 = vmatprep.subr.mxu0 0.0
      %1928 = vmatpush1.msra.mxu0 0.0
      %1929 = vmatprep.subr.mxu0 0.0
      %1930 = vmatpush1.msra.mxu0 0.0
      %1931 = vmatprep.subr.mxu0 0.0
      %1932 = vmatpush1.msra.mxu0 0.0
      %1933 = vmatprep.subr.mxu0 0.0
      %1934 = vmatpush1.msra.mxu0 0.0
      %1935 = vmatprep.mubr.f32.mxu0 0.0
      %1936 = vmatmul.mubr.f32.gmra.mrb[0].mxu0 %v1870
      %v1937 = vpop.f32.mrb[0].mxu0
      %v1938 = vadd.f32 %v1790, %v1937
      %v1939 = vpop.f32.mrb[0].mxu0
      %1940 = vdwg.mxu0
      %v1941 = vadd.f32 %v1938, %v146
      %v1942 = vtanh.pop %v1941
      %v1943 = vsel %vm1869, %v1942, %v1719
      %1944 = vst [vmem:[#allocation2] sm:$0xff] %v1870
      %1945 = vst [vmem:[#allocation2 + $0x8] sm:$0xff] %v1943
    $region49: #{tpu_custom_call.1} parent=1 // pred_fallthru
      _
    // Predicated region
    $region50: #{tpu_custom_call.1} parent=1 // pred_check
      %p1946 = pneg %p81
    $region51: #{tpu_custom_call.1} parent=1 // pred_check_branch
      %1948 = sbr.rel (%p1946) target = $region53
    $region52: #{tpu_custom_call.1} parent=1 // pred_region
      %v1949 = vld [vmem:[#allocation2 + $0x8] sm:$0xff]
      %1950 = vst [vmem:[#allocation13] sm:$0xff] %v1949
    $region53: #{tpu_custom_call.1} parent=1 // pred_fallthru
      _
    // Predicated region
    $region54: #{tpu_custom_call.1} parent=1 // pred_check
      _
    $region55: #{tpu_custom_call.1} parent=1 // pred_check_branch
      %1952 = sbr.rel (0) target = $region57
    $region56: #{tpu_custom_call.1} parent=1 // pred_region
      %s1954 = ssub.s32 128, 128
      %1955 = vsyncadd [#allocation7], %s1954
      %s1957 = sshll.u32 [#allocation13], 4
      %s1958 = int_to_ptr.vmem [resolvable:$true] %s1957
      %1960 = dma.vmem_to_hbm [thread:$0]  %s1958, 128, %s7, [#allocation7]
    $region57: #{tpu_custom_call.1} parent=1 // pred_fallthru
      _
    // Predicated region
    $region58: #{tpu_custom_call.1} parent=1 // pred_check
      _
    $region59: #{tpu_custom_call.1} parent=1 // pred_check_branch
      %1962 = sbr.rel (0) target = $region61
    $region60: #{tpu_custom_call.1} parent=1 // pred_region
      %1963 = dma.done [#allocation7], 128
    $region61: #{tpu_custom_call.1} parent=1 // pred_fallthru
      _
    %1964 = vsyncpa [#allocation6], 1
    %1965 = vsyncpa [#allocation9], 1
    %1966 = vsyncpa [#allocation12], 1
    %1967 = vsyncpa [#allocation7], 1

</llo_original>
